<compile_context>
chip_gen: v5e
topology: v5e:2x2
jax: 0.10.0
libtpu: 0.0.40
codegen_flags: <defaults>
</compile_context>

<pallas_src>
import functools

import jax
import jax.numpy as jnp
from jax import lax
from jax.experimental import pallas as pl
from jax.experimental.pallas import tpu as pltpu

NUM_CHANNELS = 128
IN_DIM = 6


def _nonlocal_kernel(coords_ref, w0_ref, wc_ref, wqkv_ref,
                     wf1_ref, wf2_ref, wf3_ref, vec_ref, bqkv_ref,
                     out_ref, *scratch, n_real):
    tb = coords_ref.shape[0]          # batch items handled by this grid step
    n = coords_ref.shape[2]           # padded number of correspondences
    C = wc_ref.shape[0]               # num_channels
    f32 = jnp.float32
    cdt = wc_ref.dtype                # MXU compute dtype (bf16)
    inv_sqrt_c = 1.0 / float(C) ** 0.5
    inv_sigma2 = 1.0 / (1.2 * 1.2)
    inv_n = 1.0 / float(n_real)
    stack_scratch = scratch[0] if scratch else None   # only allocated when tb > 1

    # packed per-channel vectors: one (8, C) f32 tile, rows sliced as views
    b0 = vec_ref[0:1, :]
    sc, shc = vec_ref[1:2, :], vec_ref[2:3, :]
    s1, sh1 = vec_ref[3:4, :], vec_ref[4:5, :]
    s2, sh2 = vec_ref[5:6, :], vec_ref[6:7, :]
    bf3 = vec_ref[7:8, :]

    dn_t0 = (((0,), (0,)), ((), ()))       # contract axis 0 of both (lhs^T @ rhs)
    dn_qkT = (((1,), (1,)), ((), ()))      # contract channel axis (q @ k^T)

    # coordinates stay in the native [6, n] (channel, point) layout;
    # per-channel mean over points (matches corr_feat - corr_feat.mean(dim=-1)).
    coords = coords_ref[...]                                            # [tb,6,n]
    coords_c = coords - jnp.sum(coords, axis=2, keepdims=True) * inv_n

    # ---- layer0: Conv1d(6 -> C) with bias (2-D dots, no [n,6] intermediates) ----
    feat0_parts = []
    for t in range(tb):
        f0 = lax.dot_general(coords_c[t], w0_ref[...], dn_t0,
                             preferred_element_type=f32)                # [n, C]
        if tb == 1:
            feat0_parts.append(f0)
        else:
            stack_scratch[t * n:(t + 1) * n, :] = f0
    feat0 = (feat0_parts[0] if tb == 1 else stack_scratch[...]) + b0    # [tb*n, C]

    # ---- PointCN: Conv1d(C->C) + BatchNorm + ReLU ----
    # TODO(synk): BatchNorm uses eval-mode running stats folded into scale/shift
    # (conv bias folded into the shift); training-mode batch stats not reproduced.
    h = jnp.dot(feat0.astype(cdt), wc_ref[...], preferred_element_type=f32)
    feat = jnp.maximum(h * sc + shc, 0.0)                               # [tb*n, C]

    # ---- NonLocalBlock (num_heads = 1): fused Q|K|V projection, one bf16 cast ----
    qkv = jnp.dot(feat.astype(cdt), wqkv_ref[...],
                  preferred_element_type=f32) + bqkv_ref[...]           # [tb*n, 3C]
    qkv_c = qkv.astype(cdt)

    key_mask = None
    if n != n_real:        # pad key columns must receive zero softmax weight
        key_mask = lax.broadcasted_iota(jnp.int32, (1, n), 1) < n_real

    def pdist(p):          # p: [3, n] centered coords; Gram identity on the MXU
        gram = lax.dot_general(p, p, dn_t0, preferred_element_type=f32)  # [n, n]
        sq = jnp.sum(p * p, axis=0, keepdims=True)                       # [1, n]
        d2 = jnp.transpose(sq) + sq - 2.0 * gram
        return jnp.sqrt(jnp.maximum(d2, 0.0))

    msgs = []
    for t in range(tb):
        cc = coords_c[t]                                                 # [6, n]
        # spatial-consistency (compatibility) matrix, consumed immediately.
        # distances are translation-invariant so centered coords are exact.
        diff = pdist(cc[0:3]) - pdist(cc[3:6])
        compat = jnp.maximum(1.0 - diff * diff * inv_sigma2, 0.0)        # [n, n]

        q = qkv_c[t * n:(t + 1) * n, 0:C]
        k = qkv_c[t * n:(t + 1) * n, C:2 * C]
        v = qkv_c[t * n:(t + 1) * n, 2 * C:3 * C]
        attn = lax.dot_general(q, k, dn_qkT,
                               preferred_element_type=f32) * inv_sqrt_c  # [n, n]
        logits = compat * attn
        if key_mask is not None:
            logits = jnp.where(key_mask, logits, jnp.float32(-1e30))
        logits = logits - jnp.max(logits, axis=-1, keepdims=True)
        e = jnp.exp(logits)
        w = e * pl.reciprocal(jnp.sum(e, axis=-1, keepdims=True), approx=True)
        msg_t = jnp.dot(w.astype(cdt), v, preferred_element_type=f32)    # [n, C]
        if tb == 1:
            msgs.append(msg_t)
        else:
            stack_scratch[t * n:(t + 1) * n, :] = msg_t   # feat0 already consumed
    msg = msgs[0] if tb == 1 else stack_scratch[...]                     # [tb*n, C]

    # ---- fc_message (hidden width zero-padded to 128 lanes in the wrapper) ----
    m = jnp.dot(msg.astype(cdt), wf1_ref[...], preferred_element_type=f32)
    m = jnp.maximum(m * s1 + sh1, 0.0)
    m = jnp.dot(m.astype(cdt), wf2_ref[...], preferred_element_type=f32)
    m = jnp.maximum(m * s2 + sh2, 0.0)
    m = jnp.dot(m.astype(cdt), wf3_ref[...], preferred_element_type=f32) + bf3

    out = feat + m                                                       # [tb*n, C]

    # emit pre-transposed to the PyTorch [C, N] convention (saves an HBM pass)
    for t in range(tb):
        out_ref[t] = jnp.transpose(out[t * n:(t + 1) * n, :]).astype(out_ref.dtype)


def init_params(key):
    C = NUM_CHANNELS
    H = C // 2
    keys = iter(jax.random.split(key, 32))

    def w(shape, scale=0.05):
        return jax.random.normal(next(keys), shape, jnp.float32) * scale

    def bn(dim, eps=1e-5):
        gamma = 1.0 + 0.1 * jax.random.normal(next(keys), (1, dim), jnp.float32)
        beta = 0.1 * jax.random.normal(next(keys), (1, dim), jnp.float32)
        running_mean = jnp.zeros((1, dim), jnp.float32)
        running_var = jnp.ones((1, dim), jnp.float32)
        scale = gamma / jnp.sqrt(running_var + eps)
        shift = beta - running_mean * scale
        return scale, shift

    w0, b0 = w((IN_DIM, C)), w((1, C))
    wc, bc = w((C, C)), w((1, C))
    sc, shc = bn(C)
    wq, bq = w((C, C)), w((1, C))
    wk, bk = w((C, C)), w((1, C))
    wv, bv = w((C, C)), w((1, C))
    wf1, bf1 = w((C, H)), w((1, H))
    s1, sh1 = bn(H)
    wf2, bf2 = w((H, H)), w((1, H))
    s2, sh2 = bn(H)
    wf3, bf3 = w((H, C)), w((1, C))

    return [w0, b0, wc, bc, sc, shc,
            wq, bq, wk, bk, wv, bv,
            wf1, bf1, s1, sh1,
            wf2, bf2, s2, sh2,
            wf3, bf3]


def nonlocal_net_flow(src_keypts, tgt_keypts, idx, params):
    """src_keypts/tgt_keypts: [bs, 3, N] (PyTorch convention), idx: [bs, N].

    Returns feat: [bs, NUM_CHANNELS, N] (PyTorch convention)."""
    bs, three, n = src_keypts.shape
    assert three == 3
    C = NUM_CHANNELS
    f32, bf16 = jnp.float32, jnp.bfloat16

    # tb: batch items per grid step.  Keep grid length >= 2 so the grid axis can
    # shard across v7x's two TensorCores; only stack to M=256 when bs >= 4
    # (v5e/v6e, single TC).  On v5e the 128-shaped matmuls already fill the MXU.
    tb = 2 if (bs >= 4 and bs % 2 == 0) else 1
    # lane-dense N (masked out of the softmax in-kernel when padded)
    n_pad = max(128, ((n + 127) // 128) * 128)

    # pointutil glue: gather tgt points by idx in the native [bs, 3, N] layout,
    # then stack src|tgt channels so the kernel sees one [bs, 6, N] block.
    gather_idx = jnp.broadcast_to(idx.astype(jnp.int32)[:, None, :], (bs, 3, n))
    tgt = jnp.take_along_axis(tgt_keypts.astype(f32), gather_idx, axis=2)
    coords = jnp.concatenate([src_keypts.astype(f32), tgt], axis=1)      # [bs,6,n]
    if n_pad != n:
        coords = jnp.pad(coords, ((0, 0), (0, 0), (0, n_pad - n)))

    (w0, b0, wc, bc, sc, shc,
     wq, bq, wk, bk, wv, bv,
     wf1, bf1, s1, sh1,
     wf2, bf2, s2, sh2,
     wf3, bf3) = params
    H = wf1.shape[1]
    ph = C - H                      # zero-pad fc_message hidden width to 128 lanes

    def padc(v):                    # [1, H] -> [1, C]
        return jnp.pad(v, ((0, 0), (0, ph)))

    # conv biases of BN'd layers are folded into the BN shift; all tiny [1,C]
    # vectors are packed into a single (8, C) tile (one DMA, one vreg).
    vecs = jnp.concatenate([
        b0, sc, bc * sc + shc,
        padc(s1), padc(bf1 * s1 + sh1),
        padc(s2), padc(bf2 * s2 + sh2),
        bf3], axis=0).astype(f32)                                        # [8, C]

    prepared = [
        w0.astype(f32),                                                  # [6, C]
        wc.astype(bf16),                                                 # [C, C]
        jnp.concatenate([wq, wk, wv], axis=1).astype(bf16),              # [C, 3C]
        jnp.pad(wf1, ((0, 0), (0, ph))).astype(bf16),                    # [C, 128]
        jnp.pad(wf2, ((0, ph), (0, ph))).astype(bf16),                   # [128, 128]
        jnp.pad(wf3, ((0, ph), (0, 0))).astype(bf16),                    # [128, C]
        vecs,                                                            # [8, C]
        jnp.concatenate([bq, bk, bv], axis=1).astype(f32),               # [1, 3C]
    ]

    def full_spec(arr):
        nd = arr.ndim
        return pl.BlockSpec(arr.shape, lambda b, _nd=nd: (0,) * _nd)

    in_specs = [pl.BlockSpec((tb, IN_DIM, n_pad), lambda b: (b, 0, 0))]
    in_specs += [full_spec(p) for p in prepared]

    # VMEM planning: single-tile NxN softmax.  Cap below v7x's 64 MiB physical
    # VMEM; on v5e/v6e (128 MiB) this could be raised toward ~100 MiB for large
    # N before a flash-style key-tiled rewrite becomes necessary.
    w_bytes = sum(int(p.size) * p.dtype.itemsize for p in prepared)
    vmem_need = (6 * n_pad * n_pad * 4                   # live NxN f32 buffers
                 + 16 * tb * n_pad * C * 4               # stacked activations
                 + 2 * tb * n_pad * (IN_DIM + C) * 4     # double-buffered IO blocks
                 + 2 * w_bytes + (2 << 20))
    vmem_limit = int(min(max(vmem_need, 32 << 20), 56 << 20))

    # advisory cost estimate so XLA schedules the surrounding gather well
    conv_flops = 2 * n_pad * (IN_DIM * C + C * C + C * 3 * C + 3 * C * C)
    attn_flops = 4 * n_pad * n_pad * C
    gram_flops = 2 * 2 * n_pad * n_pad * 3
    ew_flops = 16 * n_pad * n_pad
    cost = pl.CostEstimate(
        flops=int(bs * (conv_flops + attn_flops + gram_flops + ew_flops)),
        transcendentals=int(bs * (3 * n_pad * n_pad + n_pad)),
        bytes_accessed=int(4 * bs * n_pad * (IN_DIM + C) + w_bytes))

    scratch_shapes = ([pltpu.VMEM((tb * n_pad, C), f32)] if tb > 1 else [])

    out = pl.pallas_call(
        functools.partial(_nonlocal_kernel, n_real=n),
        out_shape=jax.ShapeDtypeStruct((bs, C, n_pad), f32),
        grid=(bs // tb,),
        in_specs=in_specs,
        out_specs=pl.BlockSpec((tb, C, n_pad), lambda b: (b, 0, 0)),
        scratch_shapes=scratch_shapes,
        compiler_params=pltpu.CompilerParams(
            dimension_semantics=("parallel",),
            vmem_limit_bytes=vmem_limit),
        cost_estimate=cost,
    )(coords, *prepared)

    if n_pad != n:
        out = out[:, :, :n]
    return out    # [bs, C, N], PyTorch convention


if __name__ == "__main__":
    bs, n = 2, 128
    key = jax.random.PRNGKey(0)
    k_src, k_tgt, k_idx, k_params = jax.random.split(key, 4)

    src_keypts = jax.random.normal(k_src, (bs, 3, n), jnp.float32)
    tgt_keypts = jax.random.normal(k_tgt, (bs, 3, n), jnp.float32)
    idx = jax.random.randint(k_idx, (bs, n), 0, n, dtype=jnp.int32)

    params = init_params(k_params)

    feat = jax.jit(nonlocal_net_flow)(src_keypts, tgt_keypts, idx, params)
    feat = jax.block_until_ready(feat)

    assert feat.shape == (bs, NUM_CHANNELS, n), feat.shape
    assert bool(jnp.all(jnp.isfinite(feat)))
    print("KERNEL_OK")
</pallas_src>

<mosaic_0001>
module attributes {stable_mosaic.version = 11 : i64} {
  func.func @_nonlocal_kernel(%arg0: i32, %arg1: memref<1x6x128xf32, #tpu.memory_space<vmem>>, %arg2: memref<6x128xf32, #tpu.memory_space<vmem>>, %arg3: memref<128x128xbf16, #tpu.memory_space<vmem>>, %arg4: memref<128x384xbf16, #tpu.memory_space<vmem>>, %arg5: memref<128x128xbf16, #tpu.memory_space<vmem>>, %arg6: memref<128x128xbf16, #tpu.memory_space<vmem>>, %arg7: memref<128x128xbf16, #tpu.memory_space<vmem>>, %arg8: memref<8x128xf32, #tpu.memory_space<vmem>>, %arg9: memref<1x384xf32, #tpu.memory_space<vmem>>, %arg10: memref<1x128x128xf32, #tpu.memory_space<vmem>>) attributes {dimension_semantics = [#tpu.dimension_semantics<parallel>], iteration_bounds = array<i64: 2>, scalar_prefetch = 0 : i64, scratch_operands = 0 : i64, tpu.core_type = #tpu.core_type<tc>, window_params = [{transform_indices = @transform_0, window_bounds = array<i64: 1, 6, 128>}, {pipeline_mode = #tpu.pipeline_mode<synchronous>, transform_indices = @transform_1, window_bounds = array<i64: 6, 128>}, {pipeline_mode = #tpu.pipeline_mode<synchronous>, transform_indices = @transform_2, window_bounds = array<i64: 128, 128>}, {pipeline_mode = #tpu.pipeline_mode<synchronous>, transform_indices = @transform_3, window_bounds = array<i64: 128, 384>}, {pipeline_mode = #tpu.pipeline_mode<synchronous>, transform_indices = @transform_4, window_bounds = array<i64: 128, 128>}, {pipeline_mode = #tpu.pipeline_mode<synchronous>, transform_indices = @transform_5, window_bounds = array<i64: 128, 128>}, {pipeline_mode = #tpu.pipeline_mode<synchronous>, transform_indices = @transform_6, window_bounds = array<i64: 128, 128>}, {pipeline_mode = #tpu.pipeline_mode<synchronous>, transform_indices = @transform_7, window_bounds = array<i64: 8, 128>}, {pipeline_mode = #tpu.pipeline_mode<synchronous>, transform_indices = @transform_8, window_bounds = array<i64: 1, 384>}, {transform_indices = @transform_9, window_bounds = array<i64: 1, 128, 128>}]} {
    %c0 = arith.constant 0 : index
    %c0_0 = arith.constant 0 : index
    %0 = vector.load %arg8[%c0, %c0_0] : memref<8x128xf32, #tpu.memory_space<vmem>>, vector<1x128xf32>
    %c1 = arith.constant 1 : index
    %c0_1 = arith.constant 0 : index
    %1 = vector.load %arg8[%c1, %c0_1] : memref<8x128xf32, #tpu.memory_space<vmem>>, vector<1x128xf32>
    %c2 = arith.constant 2 : index
    %c0_2 = arith.constant 0 : index
    %2 = vector.load %arg8[%c2, %c0_2] : memref<8x128xf32, #tpu.memory_space<vmem>>, vector<1x128xf32>
    %c3 = arith.constant 3 : index
    %c0_3 = arith.constant 0 : index
    %3 = vector.load %arg8[%c3, %c0_3] : memref<8x128xf32, #tpu.memory_space<vmem>>, vector<1x128xf32>
    %c4 = arith.constant 4 : index
    %c0_4 = arith.constant 0 : index
    %4 = vector.load %arg8[%c4, %c0_4] : memref<8x128xf32, #tpu.memory_space<vmem>>, vector<1x128xf32>
    %c5 = arith.constant 5 : index
    %c0_5 = arith.constant 0 : index
    %5 = vector.load %arg8[%c5, %c0_5] : memref<8x128xf32, #tpu.memory_space<vmem>>, vector<1x128xf32>
    %c6 = arith.constant 6 : index
    %c0_6 = arith.constant 0 : index
    %6 = vector.load %arg8[%c6, %c0_6] : memref<8x128xf32, #tpu.memory_space<vmem>>, vector<1x128xf32>
    %c7 = arith.constant 7 : index
    %c0_7 = arith.constant 0 : index
    %7 = vector.load %arg8[%c7, %c0_7] : memref<8x128xf32, #tpu.memory_space<vmem>>, vector<1x128xf32>
    %c0_8 = arith.constant 0 : index
    %c0_9 = arith.constant 0 : index
    %c0_10 = arith.constant 0 : index
    %8 = vector.load %arg1[%c0_8, %c0_9, %c0_10] : memref<1x6x128xf32, #tpu.memory_space<vmem>>, vector<1x6x128xf32>
    %cst = arith.constant dense<0.000000e+00> : vector<1x6xf32>
    %9 = vector.multi_reduction <add>, %8, %cst [2] : vector<1x6x128xf32> to vector<1x6xf32>
    %10 = vector.shape_cast %9 : vector<1x6xf32> to vector<1x6x1xf32>
    %cst_11 = arith.constant 7.812500e-03 : f32
    %11 = vector.broadcast %cst_11 : f32 to vector<1x6x1xf32>
    %12 = arith.mulf %10, %11 : vector<1x6x1xf32>
    %13 = vector.broadcast %12 : vector<1x6x1xf32> to vector<1x6x128xf32>
    %14 = arith.subf %8, %13 : vector<1x6x128xf32>
    %15 = vector.shape_cast %14 : vector<1x6x128xf32> to vector<6x128xf32>
    %c0_12 = arith.constant 0 : index
    %c0_13 = arith.constant 0 : index
    %16 = vector.load %arg2[%c0_12, %c0_13] : memref<6x128xf32, #tpu.memory_space<vmem>>, vector<6x128xf32>
    %cst_14 = arith.constant dense<0.000000e+00> : vector<128x128xf32>
    %17 = tpu.matmul %15, %16, %cst_14 {dimension_numbers = #tpu.dot_dimension_numbers<[0], [0], [1], [1], [0, 1, 1, 1], [], []>} : vector<6x128xf32>, vector<6x128xf32>, vector<128x128xf32> -> vector<128x128xf32>
    %18 = vector.broadcast %0 : vector<1x128xf32> to vector<128x128xf32>
    %19 = arith.addf %17, %18 : vector<128x128xf32>
    %20 = arith.truncf %19 : vector<128x128xf32> to vector<128x128xbf16>
    %c0_15 = arith.constant 0 : index
    %c0_16 = arith.constant 0 : index
    %21 = vector.load %arg3[%c0_15, %c0_16] : memref<128x128xbf16, #tpu.memory_space<vmem>>, vector<128x128xbf16>
    %cst_17 = arith.constant dense<0.000000e+00> : vector<128x128xf32>
    %22 = tpu.matmul %20, %21, %cst_17 {dimension_numbers = #tpu.dot_dimension_numbers<[1], [0], [0], [1], [0, 0, 1, 1], [], []>} : vector<128x128xbf16>, vector<128x128xbf16>, vector<128x128xf32> -> vector<128x128xf32>
    %23 = vector.broadcast %1 : vector<1x128xf32> to vector<128x128xf32>
    %24 = arith.mulf %22, %23 : vector<128x128xf32>
    %25 = vector.broadcast %2 : vector<1x128xf32> to vector<128x128xf32>
    %26 = arith.addf %24, %25 : vector<128x128xf32>
    %cst_18 = arith.constant 0.000000e+00 : f32
    %27 = vector.broadcast %cst_18 : f32 to vector<128x128xf32>
    %28 = arith.maximumf %26, %27 : vector<128x128xf32>
    %29 = arith.truncf %28 : vector<128x128xf32> to vector<128x128xbf16>
    %c0_19 = arith.constant 0 : index
    %c0_20 = arith.constant 0 : index
    %30 = vector.load %arg4[%c0_19, %c0_20] : memref<128x384xbf16, #tpu.memory_space<vmem>>, vector<128x384xbf16>
    %cst_21 = arith.constant dense<0.000000e+00> : vector<128x384xf32>
    %31 = tpu.matmul %29, %30, %cst_21 {dimension_numbers = #tpu.dot_dimension_numbers<[1], [0], [0], [1], [0, 0, 1, 1], [], []>} : vector<128x128xbf16>, vector<128x384xbf16>, vector<128x384xf32> -> vector<128x384xf32>
    %c0_22 = arith.constant 0 : index
    %c0_23 = arith.constant 0 : index
    %32 = vector.load %arg9[%c0_22, %c0_23] : memref<1x384xf32, #tpu.memory_space<vmem>>, vector<1x384xf32>
    %33 = vector.broadcast %32 : vector<1x384xf32> to vector<128x384xf32>
    %34 = arith.addf %31, %33 : vector<128x384xf32>
    %35 = arith.truncf %34 : vector<128x384xf32> to vector<128x384xbf16>
    %36 = vector.shape_cast %14 : vector<1x6x128xf32> to vector<6x128xf32>
    %37 = vector.extract_strided_slice %36 {offsets = [0, 0], sizes = [3, 128], strides = [1, 1]} : vector<6x128xf32> to vector<3x128xf32>
    %cst_24 = arith.constant dense<0.000000e+00> : vector<128x128xf32>
    %38 = tpu.matmul %37, %37, %cst_24 {dimension_numbers = #tpu.dot_dimension_numbers<[0], [0], [1], [1], [0, 1, 1, 1], [], []>} : vector<3x128xf32>, vector<3x128xf32>, vector<128x128xf32> -> vector<128x128xf32>
    %39 = arith.mulf %37, %37 : vector<3x128xf32>
    %cst_25 = arith.constant dense<0.000000e+00> : vector<128xf32>
    %40 = vector.multi_reduction <add>, %39, %cst_25 [0] : vector<3x128xf32> to vector<128xf32>
    %41 = vector.shape_cast %40 : vector<128xf32> to vector<1x128xf32>
    %42 = tpu.transpose %41, [1, 0] : vector<1x128xf32> -> vector<128x1xf32>
    %43 = vector.broadcast %42 : vector<128x1xf32> to vector<128x128xf32>
    %44 = vector.broadcast %41 : vector<1x128xf32> to vector<128x128xf32>
    %45 = arith.addf %43, %44 : vector<128x128xf32>
    %cst_26 = arith.constant 2.000000e+00 : f32
    %46 = vector.broadcast %cst_26 : f32 to vector<128x128xf32>
    %47 = arith.mulf %46, %38 : vector<128x128xf32>
    %48 = arith.subf %45, %47 : vector<128x128xf32>
    %cst_27 = arith.constant 0.000000e+00 : f32
    %49 = vector.broadcast %cst_27 : f32 to vector<128x128xf32>
    %50 = arith.maximumf %48, %49 : vector<128x128xf32>
    %51 = math.sqrt %50 : vector<128x128xf32>
    %52 = vector.extract_strided_slice %36 {offsets = [3, 0], sizes = [3, 128], strides = [1, 1]} : vector<6x128xf32> to vector<3x128xf32>
    %cst_28 = arith.constant dense<0.000000e+00> : vector<128x128xf32>
    %53 = tpu.matmul %52, %52, %cst_28 {dimension_numbers = #tpu.dot_dimension_numbers<[0], [0], [1], [1], [0, 1, 1, 1], [], []>} : vector<3x128xf32>, vector<3x128xf32>, vector<128x128xf32> -> vector<128x128xf32>
    %54 = arith.mulf %52, %52 : vector<3x128xf32>
    %cst_29 = arith.constant dense<0.000000e+00> : vector<128xf32>
    %55 = vector.multi_reduction <add>, %54, %cst_29 [0] : vector<3x128xf32> to vector<128xf32>
    %56 = vector.shape_cast %55 : vector<128xf32> to vector<1x128xf32>
    %57 = tpu.transpose %56, [1, 0] : vector<1x128xf32> -> vector<128x1xf32>
    %58 = vector.broadcast %57 : vector<128x1xf32> to vector<128x128xf32>
    %59 = vector.broadcast %56 : vector<1x128xf32> to vector<128x128xf32>
    %60 = arith.addf %58, %59 : vector<128x128xf32>
    %cst_30 = arith.constant 2.000000e+00 : f32
    %61 = vector.broadcast %cst_30 : f32 to vector<128x128xf32>
    %62 = arith.mulf %61, %53 : vector<128x128xf32>
    %63 = arith.subf %60, %62 : vector<128x128xf32>
    %cst_31 = arith.constant 0.000000e+00 : f32
    %64 = vector.broadcast %cst_31 : f32 to vector<128x128xf32>
    %65 = arith.maximumf %63, %64 : vector<128x128xf32>
    %66 = math.sqrt %65 : vector<128x128xf32>
    %67 = arith.subf %51, %66 : vector<128x128xf32>
    %68 = arith.mulf %67, %67 : vector<128x128xf32>
    %cst_32 = arith.constant 0.694444418 : f32
    %69 = vector.broadcast %cst_32 : f32 to vector<128x128xf32>
    %70 = arith.mulf %68, %69 : vector<128x128xf32>
    %cst_33 = arith.constant 1.000000e+00 : f32
    %71 = vector.broadcast %cst_33 : f32 to vector<128x128xf32>
    %72 = arith.subf %71, %70 : vector<128x128xf32>
    %cst_34 = arith.constant 0.000000e+00 : f32
    %73 = vector.broadcast %cst_34 : f32 to vector<128x128xf32>
    %74 = arith.maximumf %72, %73 : vector<128x128xf32>
    %75 = vector.extract_strided_slice %35 {offsets = [0, 0], sizes = [128, 128], strides = [1, 1]} : vector<128x384xbf16> to vector<128x128xbf16>
    %76 = vector.extract_strided_slice %35 {offsets = [0, 128], sizes = [128, 128], strides = [1, 1]} : vector<128x384xbf16> to vector<128x128xbf16>
    %77 = vector.extract_strided_slice %35 {offsets = [0, 256], sizes = [128, 128], strides = [1, 1]} : vector<128x384xbf16> to vector<128x128xbf16>
    %cst_35 = arith.constant dense<0.000000e+00> : vector<128x128xf32>
    %78 = tpu.matmul %75, %76, %cst_35 {dimension_numbers = #tpu.dot_dimension_numbers<[1], [1], [0], [0], [0, 0, 1, 0], [], []>} : vector<128x128xbf16>, vector<128x128xbf16>, vector<128x128xf32> -> vector<128x128xf32>
    %cst_36 = arith.constant 0.0883883461 : f32
    %79 = vector.broadcast %cst_36 : f32 to vector<128x128xf32>
    %80 = arith.mulf %78, %79 : vector<128x128xf32>
    %81 = arith.mulf %74, %80 : vector<128x128xf32>
    %cst_37 = arith.constant dense<0xFF800000> : vector<128xf32>
    %82 = vector.multi_reduction <maximumf>, %81, %cst_37 [1] : vector<128x128xf32> to vector<128xf32>
    %83 = vector.shape_cast %82 : vector<128xf32> to vector<128x1xf32>
    %84 = vector.broadcast %83 : vector<128x1xf32> to vector<128x128xf32>
    %85 = arith.subf %81, %84 : vector<128x128xf32>
    %86 = math.exp %85 : vector<128x128xf32>
    %cst_38 = arith.constant dense<0.000000e+00> : vector<128xf32>
    %87 = vector.multi_reduction <add>, %86, %cst_38 [1] : vector<128x128xf32> to vector<128xf32>
    %88 = vector.shape_cast %87 : vector<128xf32> to vector<128x1xf32>
    %89 = tpu.reciprocal %88 {approx = true} : vector<128x1xf32> -> vector<128x1xf32>
    %90 = vector.broadcast %89 : vector<128x1xf32> to vector<128x128xf32>
    %91 = arith.mulf %86, %90 : vector<128x128xf32>
    %92 = arith.truncf %91 : vector<128x128xf32> to vector<128x128xbf16>
    %cst_39 = arith.constant dense<0.000000e+00> : vector<128x128xf32>
    %93 = tpu.matmul %92, %77, %cst_39 {dimension_numbers = #tpu.dot_dimension_numbers<[1], [0], [0], [1], [0, 0, 1, 1], [], []>} : vector<128x128xbf16>, vector<128x128xbf16>, vector<128x128xf32> -> vector<128x128xf32>
    %94 = arith.truncf %93 : vector<128x128xf32> to vector<128x128xbf16>
    %c0_40 = arith.constant 0 : index
    %c0_41 = arith.constant 0 : index
    %95 = vector.load %arg5[%c0_40, %c0_41] : memref<128x128xbf16, #tpu.memory_space<vmem>>, vector<128x128xbf16>
    %cst_42 = arith.constant dense<0.000000e+00> : vector<128x128xf32>
    %96 = tpu.matmul %94, %95, %cst_42 {dimension_numbers = #tpu.dot_dimension_numbers<[1], [0], [0], [1], [0, 0, 1, 1], [], []>} : vector<128x128xbf16>, vector<128x128xbf16>, vector<128x128xf32> -> vector<128x128xf32>
    %97 = vector.broadcast %3 : vector<1x128xf32> to vector<128x128xf32>
    %98 = arith.mulf %96, %97 : vector<128x128xf32>
    %99 = vector.broadcast %4 : vector<1x128xf32> to vector<128x128xf32>
    %100 = arith.addf %98, %99 : vector<128x128xf32>
    %cst_43 = arith.constant 0.000000e+00 : f32
    %101 = vector.broadcast %cst_43 : f32 to vector<128x128xf32>
    %102 = arith.maximumf %100, %101 : vector<128x128xf32>
    %103 = arith.truncf %102 : vector<128x128xf32> to vector<128x128xbf16>
    %c0_44 = arith.constant 0 : index
    %c0_45 = arith.constant 0 : index
    %104 = vector.load %arg6[%c0_44, %c0_45] : memref<128x128xbf16, #tpu.memory_space<vmem>>, vector<128x128xbf16>
    %cst_46 = arith.constant dense<0.000000e+00> : vector<128x128xf32>
    %105 = tpu.matmul %103, %104, %cst_46 {dimension_numbers = #tpu.dot_dimension_numbers<[1], [0], [0], [1], [0, 0, 1, 1], [], []>} : vector<128x128xbf16>, vector<128x128xbf16>, vector<128x128xf32> -> vector<128x128xf32>
    %106 = vector.broadcast %5 : vector<1x128xf32> to vector<128x128xf32>
    %107 = arith.mulf %105, %106 : vector<128x128xf32>
    %108 = vector.broadcast %6 : vector<1x128xf32> to vector<128x128xf32>
    %109 = arith.addf %107, %108 : vector<128x128xf32>
    %cst_47 = arith.constant 0.000000e+00 : f32
    %110 = vector.broadcast %cst_47 : f32 to vector<128x128xf32>
    %111 = arith.maximumf %109, %110 : vector<128x128xf32>
    %112 = arith.truncf %111 : vector<128x128xf32> to vector<128x128xbf16>
    %c0_48 = arith.constant 0 : index
    %c0_49 = arith.constant 0 : index
    %113 = vector.load %arg7[%c0_48, %c0_49] : memref<128x128xbf16, #tpu.memory_space<vmem>>, vector<128x128xbf16>
    %cst_50 = arith.constant dense<0.000000e+00> : vector<128x128xf32>
    %114 = tpu.matmul %112, %113, %cst_50 {dimension_numbers = #tpu.dot_dimension_numbers<[1], [0], [0], [1], [0, 0, 1, 1], [], []>} : vector<128x128xbf16>, vector<128x128xbf16>, vector<128x128xf32> -> vector<128x128xf32>
    %115 = vector.broadcast %7 : vector<1x128xf32> to vector<128x128xf32>
    %116 = arith.addf %114, %115 : vector<128x128xf32>
    %117 = arith.addf %28, %116 : vector<128x128xf32>
    %118 = tpu.transpose %117, [1, 0] : vector<128x128xf32> -> vector<128x128xf32>
    %c0_51 = arith.constant 0 : index
    %c0_52 = arith.constant 0 : index
    %c0_53 = arith.constant 0 : index
    %119 = vector.load %arg10[%c0_51, %c0_52, %c0_53] : memref<1x128x128xf32, #tpu.memory_space<vmem>>, vector<1x128x128xf32>
    %120 = vector.shape_cast %119 : vector<1x128x128xf32> to vector<128x128xf32>
    %121 = vector.shape_cast %118 : vector<128x128xf32> to vector<1x128x128xf32>
    tpu.vector_store %arg10[%c0_51, %c0_52, %c0_53], %121 {strides = array<i32>} : memref<1x128x128xf32, #tpu.memory_space<vmem>>, vector<1x128x128xf32>,
    return
  }
  func.func @transform_0(%arg0: i32) -> (i32, i32, i32) {
    %c0_i32 = arith.constant 0 : i32
    %c0_i32_0 = arith.constant 0 : i32
    %c0_i32_1 = arith.constant 0 : i32
    return %arg0, %c0_i32, %c0_i32_0 : i32, i32, i32
  }
  func.func @transform_1(%arg0: i32) -> (i32, i32) {
    %c0_i32 = arith.constant 0 : i32
    %c0_i32_0 = arith.constant 0 : i32
    %c0_i32_1 = arith.constant 0 : i32
    return %c0_i32, %c0_i32_0 : i32, i32
  }
  func.func @transform_2(%arg0: i32) -> (i32, i32) {
    %c0_i32 = arith.constant 0 : i32
    %c0_i32_0 = arith.constant 0 : i32
    %c0_i32_1 = arith.constant 0 : i32
    return %c0_i32, %c0_i32_0 : i32, i32
  }
  func.func @transform_3(%arg0: i32) -> (i32, i32) {
    %c0_i32 = arith.constant 0 : i32
    %c0_i32_0 = arith.constant 0 : i32
    %c0_i32_1 = arith.constant 0 : i32
    return %c0_i32, %c0_i32_0 : i32, i32
  }
  func.func @transform_4(%arg0: i32) -> (i32, i32) {
    %c0_i32 = arith.constant 0 : i32
    %c0_i32_0 = arith.constant 0 : i32
    %c0_i32_1 = arith.constant 0 : i32
    return %c0_i32, %c0_i32_0 : i32, i32
  }
  func.func @transform_5(%arg0: i32) -> (i32, i32) {
    %c0_i32 = arith.constant 0 : i32
    %c0_i32_0 = arith.constant 0 : i32
    %c0_i32_1 = arith.constant 0 : i32
    return %c0_i32, %c0_i32_0 : i32, i32
  }
  func.func @transform_6(%arg0: i32) -> (i32, i32) {
    %c0_i32 = arith.constant 0 : i32
    %c0_i32_0 = arith.constant 0 : i32
    %c0_i32_1 = arith.constant 0 : i32
    return %c0_i32, %c0_i32_0 : i32, i32
  }
  func.func @transform_7(%arg0: i32) -> (i32, i32) {
    %c0_i32 = arith.constant 0 : i32
    %c0_i32_0 = arith.constant 0 : i32
    %c0_i32_1 = arith.constant 0 : i32
    return %c0_i32, %c0_i32_0 : i32, i32
  }
  func.func @transform_8(%arg0: i32) -> (i32, i32) {
    %c0_i32 = arith.constant 0 : i32
    %c0_i32_0 = arith.constant 0 : i32
    %c0_i32_1 = arith.constant 0 : i32
    return %c0_i32, %c0_i32_0 : i32, i32
  }
  func.func @transform_9(%arg0: i32) -> (i32, i32, i32) {
    %c0_i32 = arith.constant 0 : i32
    %c0_i32_0 = arith.constant 0 : i32
    %c0_i32_1 = arith.constant 0 : i32
    return %arg0, %c0_i32, %c0_i32_0 : i32, i32, i32
  }
}

</mosaic_0001>

<llo_original>
// kernel: nonlocal_net_flow.1
$region0: #{nonlocal_net_flow.1}
  #allocation0 [shape = 'u32[]', space=smem, size = 0x4, offset = 0x4, fixed_abs, tag = 'smem constant byte address 0x4 - core index']
  #allocation1 [shape = 'u32[72,128]{1,0:T(1,128)}', space=vmem, size = 0x9000, scoped, tag = 'internal scratch']
  %s0 = inlined_call_operand.vmem [shape: f32[2,6,128], index: 0, kind: input, shape index: {}]
  %s1 = inlined_call_operand.vmem [shape: f32[6,128], index: 1, kind: input, shape index: {}]
  %s2 = inlined_call_operand.vmem [shape: bf16[128,128], index: 2, kind: input, shape index: {}]
  %s3 = inlined_call_operand.vmem [shape: bf16[128,384], index: 3, kind: input, shape index: {}]
  %s4 = inlined_call_operand.vmem [shape: bf16[128,128], index: 4, kind: input, shape index: {}]
  %s5 = inlined_call_operand.vmem [shape: bf16[128,128], index: 5, kind: input, shape index: {}]
  %s6 = inlined_call_operand.vmem [shape: bf16[128,128], index: 6, kind: input, shape index: {}]
  %s7 = inlined_call_operand.vmem [shape: f32[8,128], index: 7, kind: input, shape index: {}]
  %s8 = inlined_call_operand.vmem [shape: f32[1,384], index: 8, kind: input, shape index: {}]
  %s9 = inlined_call_operand.hbm [shape: f32[2,128,128], index: 9, kind: output, shape index: {}]
  %s10 = sld [smem:[#allocation0]]
  $region69: #{nonlocal_net_flow.1} parent=0
    _
  %s12 = ssub.s32 1, %s10
  %s13 = scalar_select 0, %s12, %s10
  $region1: #{nonlocal_net_flow.1} parent=0
    #allocation2 [shape = 'u8[131072]{0}', space=vmem, size = 0x20000, scoped, tag = 'output window, operand 0']
    #allocation3 [shape = 's32[2]{0}', space=sflag, size = 0x8, scoped, tag = 'scoped memory for nonlocal_net_flow.1']
    %14 = vsyncpa [#allocation3], 0
    %s15 = scalar_lea.sflag [#allocation3], 1
    %16 = vsyncpa %s15, 0
    loop: start=0, step=1, limit=4
    $region2: #{nonlocal_net_flow.1} parent=1 // loop_pre_header
      _
    $region3: #{nonlocal_net_flow.1} parent=1 // loop_header
      %s18 = sphi 0, %s22
      %p19 = scmp.ge.s32.totalorder %s18, 4
      %s28 = sphi 0, %s30
      %s31 = sphi 0, %s28
      %s32 = sphi 0, %s31
      %s48 = sphi 0, %s32
      %s52 = sphi 0, %s52
      %s54 = sphi 0, %s52
      %s55 = sphi 0, %s54
      %s69 = sphi 0, %s55
      %s73 = sphi 0, %s73
      %s75 = sphi 0, %s73
      %s76 = sphi 0, %s75
      %s90 = sphi 0, %s76
      %s94 = sphi 0, %s94
      %s96 = sphi 0, %s94
      %s97 = sphi 0, %s96
      %s111 = sphi 0, %s97
      %s115 = sphi 0, %s115
      %s117 = sphi 0, %s115
      %s118 = sphi 0, %s117
      %s132 = sphi 0, %s118
      %s136 = sphi 0, %s136
      %s138 = sphi 0, %s136
      %s139 = sphi 0, %s138
      %s153 = sphi 0, %s139
      %s157 = sphi 0, %s157
      %s159 = sphi 0, %s157
      %s160 = sphi 0, %s159
      %s174 = sphi 0, %s160
      %s178 = sphi 0, %s178
      %s180 = sphi 0, %s178
      %s181 = sphi 0, %s180
      %s195 = sphi 0, %s181
      %s199 = sphi 0, %s199
      %s201 = sphi 0, %s199
      %s202 = sphi 0, %s201
      %s216 = sphi 0, %s202
      %s222 = sphi 0, %s224
      %s225 = sphi 0, %s222
      %s226 = sphi 0, %s225
      %s242 = sphi 0, %s226
    $region4: #{nonlocal_net_flow.1} parent=1 // loop_header_branch
      %21 = sbr.rel (%p19) target = $region8
    $region5: #{nonlocal_net_flow.1} parent=1 // loop_body
      %s23 = ssub.s32 %s18, 1
      %s24 = ssub.s32 %s18, 2
      %s25 = sadd.s32 %s18, 1
      %s26 = ssub.s32 %s18, %s25
      %p27 = scmp.eq.s32.totalorder %s26, 0
      %s29 = sadd.s32 %s28, 1
      %s30 = scalar_select %p27, %s28, %s29
      %p33 = pneg %p27
      %p34 = scmp.eq.s32.totalorder %s18, 1
      %p35 = por %p33, %p34
      %p36 = scmp.ne.s32.totalorder %s28, %s31
      %p37 = scmp.eq.s32.totalorder %s18, 0
      %p38 = por %p36, %p37
      %p39 = scmp.ne.s32.totalorder %s28, %s31
      %p40 = scmp.eq.s32.totalorder %s23, 1
      %p41 = por %p39, %p40
      %p42 = scmp.ne.s32.totalorder %s31, %s32
      %p43 = scmp.eq.s32.totalorder %s23, 0
      %p44 = por %p42, %p43
      %p45 = scmp.ne.s32.totalorder %s31, %s32
      %p46 = scmp.eq.s32.totalorder %s24, 1
      %p47 = por %p45, %p46
      %p49 = scmp.ne.s32.totalorder %s32, %s48
      %p50 = scmp.eq.s32.totalorder %s24, 0
      %p51 = por %p49, %p50
      %s53 = sadd.s32 %s52, 1
      %p56 = scmp.eq.s32.totalorder %s18, 1
      %p57 = scmp.ne.s32.totalorder %s52, %s54
      %p58 = scmp.eq.s32.totalorder %s18, 0
      %p59 = por %p57, %p58
      %p60 = scmp.ne.s32.totalorder %s52, %s54
      %p61 = scmp.eq.s32.totalorder %s23, 1
      %p62 = por %p60, %p61
      %p63 = scmp.ne.s32.totalorder %s54, %s55
      %p64 = scmp.eq.s32.totalorder %s23, 0
      %p65 = por %p63, %p64
      %p66 = scmp.ne.s32.totalorder %s54, %s55
      %p67 = scmp.eq.s32.totalorder %s24, 1
      %p68 = por %p66, %p67
      %p70 = scmp.ne.s32.totalorder %s55, %s69
      %p71 = scmp.eq.s32.totalorder %s24, 0
      %p72 = por %p70, %p71
      %s74 = sadd.s32 %s73, 1
      %p77 = scmp.eq.s32.totalorder %s18, 1
      %p78 = scmp.ne.s32.totalorder %s73, %s75
      %p79 = scmp.eq.s32.totalorder %s18, 0
      %p80 = por %p78, %p79
      %p81 = scmp.ne.s32.totalorder %s73, %s75
      %p82 = scmp.eq.s32.totalorder %s23, 1
      %p83 = por %p81, %p82
      %p84 = scmp.ne.s32.totalorder %s75, %s76
      %p85 = scmp.eq.s32.totalorder %s23, 0
      %p86 = por %p84, %p85
      %p87 = scmp.ne.s32.totalorder %s75, %s76
      %p88 = scmp.eq.s32.totalorder %s24, 1
      %p89 = por %p87, %p88
      %p91 = scmp.ne.s32.totalorder %s76, %s90
      %p92 = scmp.eq.s32.totalorder %s24, 0
      %p93 = por %p91, %p92
      %s95 = sadd.s32 %s94, 1
      %p98 = scmp.eq.s32.totalorder %s18, 1
      %p99 = scmp.ne.s32.totalorder %s94, %s96
      %p100 = scmp.eq.s32.totalorder %s18, 0
      %p101 = por %p99, %p100
      %p102 = scmp.ne.s32.totalorder %s94, %s96
      %p103 = scmp.eq.s32.totalorder %s23, 1
      %p104 = por %p102, %p103
      %p105 = scmp.ne.s32.totalorder %s96, %s97
      %p106 = scmp.eq.s32.totalorder %s23, 0
      %p107 = por %p105, %p106
      %p108 = scmp.ne.s32.totalorder %s96, %s97
      %p109 = scmp.eq.s32.totalorder %s24, 1
      %p110 = por %p108, %p109
      %p112 = scmp.ne.s32.totalorder %s97, %s111
      %p113 = scmp.eq.s32.totalorder %s24, 0
      %p114 = por %p112, %p113
      %s116 = sadd.s32 %s115, 1
      %p119 = scmp.eq.s32.totalorder %s18, 1
      %p120 = scmp.ne.s32.totalorder %s115, %s117
      %p121 = scmp.eq.s32.totalorder %s18, 0
      %p122 = por %p120, %p121
      %p123 = scmp.ne.s32.totalorder %s115, %s117
      %p124 = scmp.eq.s32.totalorder %s23, 1
      %p125 = por %p123, %p124
      %p126 = scmp.ne.s32.totalorder %s117, %s118
      %p127 = scmp.eq.s32.totalorder %s23, 0
      %p128 = por %p126, %p127
      %p129 = scmp.ne.s32.totalorder %s117, %s118
      %p130 = scmp.eq.s32.totalorder %s24, 1
      %p131 = por %p129, %p130
      %p133 = scmp.ne.s32.totalorder %s118, %s132
      %p134 = scmp.eq.s32.totalorder %s24, 0
      %p135 = por %p133, %p134
      %s137 = sadd.s32 %s136, 1
      %p140 = scmp.eq.s32.totalorder %s18, 1
      %p141 = scmp.ne.s32.totalorder %s136, %s138
      %p142 = scmp.eq.s32.totalorder %s18, 0
      %p143 = por %p141, %p142
      %p144 = scmp.ne.s32.totalorder %s136, %s138
      %p145 = scmp.eq.s32.totalorder %s23, 1
      %p146 = por %p144, %p145
      %p147 = scmp.ne.s32.totalorder %s138, %s139
      %p148 = scmp.eq.s32.totalorder %s23, 0
      %p149 = por %p147, %p148
      %p150 = scmp.ne.s32.totalorder %s138, %s139
      %p151 = scmp.eq.s32.totalorder %s24, 1
      %p152 = por %p150, %p151
      %p154 = scmp.ne.s32.totalorder %s139, %s153
      %p155 = scmp.eq.s32.totalorder %s24, 0
      %p156 = por %p154, %p155
      %s158 = sadd.s32 %s157, 1
      %p161 = scmp.eq.s32.totalorder %s18, 1
      %p162 = scmp.ne.s32.totalorder %s157, %s159
      %p163 = scmp.eq.s32.totalorder %s18, 0
      %p164 = por %p162, %p163
      %p165 = scmp.ne.s32.totalorder %s157, %s159
      %p166 = scmp.eq.s32.totalorder %s23, 1
      %p167 = por %p165, %p166
      %p168 = scmp.ne.s32.totalorder %s159, %s160
      %p169 = scmp.eq.s32.totalorder %s23, 0
      %p170 = por %p168, %p169
      %p171 = scmp.ne.s32.totalorder %s159, %s160
      %p172 = scmp.eq.s32.totalorder %s24, 1
      %p173 = por %p171, %p172
      %p175 = scmp.ne.s32.totalorder %s160, %s174
      %p176 = scmp.eq.s32.totalorder %s24, 0
      %p177 = por %p175, %p176
      %s179 = sadd.s32 %s178, 1
      %p182 = scmp.eq.s32.totalorder %s18, 1
      %p183 = scmp.ne.s32.totalorder %s178, %s180
      %p184 = scmp.eq.s32.totalorder %s18, 0
      %p185 = por %p183, %p184
      %p186 = scmp.ne.s32.totalorder %s178, %s180
      %p187 = scmp.eq.s32.totalorder %s23, 1
      %p188 = por %p186, %p187
      %p189 = scmp.ne.s32.totalorder %s180, %s181
      %p190 = scmp.eq.s32.totalorder %s23, 0
      %p191 = por %p189, %p190
      %p192 = scmp.ne.s32.totalorder %s180, %s181
      %p193 = scmp.eq.s32.totalorder %s24, 1
      %p194 = por %p192, %p193
      %p196 = scmp.ne.s32.totalorder %s181, %s195
      %p197 = scmp.eq.s32.totalorder %s24, 0
      %p198 = por %p196, %p197
      %s200 = sadd.s32 %s199, 1
      %p203 = scmp.eq.s32.totalorder %s18, 1
      %p204 = scmp.ne.s32.totalorder %s199, %s201
      %p205 = scmp.eq.s32.totalorder %s18, 0
      %p206 = por %p204, %p205
      %p207 = scmp.ne.s32.totalorder %s199, %s201
      %p208 = scmp.eq.s32.totalorder %s23, 1
      %p209 = por %p207, %p208
      %p210 = scmp.ne.s32.totalorder %s201, %s202
      %p211 = scmp.eq.s32.totalorder %s23, 0
      %p212 = por %p210, %p211
      %p213 = scmp.ne.s32.totalorder %s201, %s202
      %p214 = scmp.eq.s32.totalorder %s24, 1
      %p215 = por %p213, %p214
      %p217 = scmp.ne.s32.totalorder %s202, %s216
      %p218 = scmp.eq.s32.totalorder %s24, 0
      %p219 = por %p217, %p218
      %s220 = ssub.s32 %s18, %s25
      %p221 = scmp.eq.s32.totalorder %s220, 0
      %s223 = sadd.s32 %s222, 1
      %s224 = scalar_select %p221, %s222, %s223
      %p227 = pneg %p221
      %p228 = scmp.eq.s32.totalorder %s18, 1
      %p229 = por %p227, %p228
      %p230 = scmp.ne.s32.totalorder %s222, %s225
      %p231 = scmp.eq.s32.totalorder %s18, 0
      %p232 = por %p230, %p231
      %p233 = scmp.ne.s32.totalorder %s222, %s225
      %p234 = scmp.eq.s32.totalorder %s23, 1
      %p235 = por %p233, %p234
      %p236 = scmp.ne.s32.totalorder %s225, %s226
      %p237 = scmp.eq.s32.totalorder %s23, 0
      %p238 = por %p236, %p237
      %p239 = scmp.ne.s32.totalorder %s225, %s226
      %p240 = scmp.eq.s32.totalorder %s24, 1
      %p241 = por %p239, %p240
      %p243 = scmp.ne.s32.totalorder %s226, %s242
      %p244 = scmp.eq.s32.totalorder %s24, 0
      %p245 = por %p243, %p244
      %p246 = scmp.le.s32.totalorder 1, %s18
      %p247 = scmp.lt.s32.totalorder %s18, 3
      %p248 = pnand %p246, %p247
      %p249 = pneg %p248
      // Predicated region
      $region9: #{nonlocal_net_flow.1} parent=5 // pred_check
        _
      $region10: #{nonlocal_net_flow.1} parent=5 // pred_check_branch
        %251 = sbr.rel (%p248) target = $region12
      $region11: #{nonlocal_net_flow.1} parent=5 // pred_region
        %s252 = ssub.s32 %s18, 1
        // Predicated region
        $region13: #{nonlocal_net_flow.1} parent=11 // pred_check
          %p253 = pneg %p65
        $region14: #{nonlocal_net_flow.1} parent=11 // pred_check_branch
          %255 = sbr.rel (%p253) target = $region16
        $region15: #{nonlocal_net_flow.1} parent=11 // pred_region
          _
        $region16: #{nonlocal_net_flow.1} parent=11 // pred_fallthru
          _
        // Predicated region
        $region17: #{nonlocal_net_flow.1} parent=11 // pred_check
          %p256 = pneg %p86
        $region18: #{nonlocal_net_flow.1} parent=11 // pred_check_branch
          %258 = sbr.rel (%p256) target = $region20
        $region19: #{nonlocal_net_flow.1} parent=11 // pred_region
          _
        $region20: #{nonlocal_net_flow.1} parent=11 // pred_fallthru
          _
        // Predicated region
        $region21: #{nonlocal_net_flow.1} parent=11 // pred_check
          %p259 = pneg %p107
        $region22: #{nonlocal_net_flow.1} parent=11 // pred_check_branch
          %261 = sbr.rel (%p259) target = $region24
        $region23: #{nonlocal_net_flow.1} parent=11 // pred_region
          _
        $region24: #{nonlocal_net_flow.1} parent=11 // pred_fallthru
          _
        // Predicated region
        $region25: #{nonlocal_net_flow.1} parent=11 // pred_check
          %p262 = pneg %p128
        $region26: #{nonlocal_net_flow.1} parent=11 // pred_check_branch
          %264 = sbr.rel (%p262) target = $region28
        $region27: #{nonlocal_net_flow.1} parent=11 // pred_region
          _
        $region28: #{nonlocal_net_flow.1} parent=11 // pred_fallthru
          _
        // Predicated region
        $region29: #{nonlocal_net_flow.1} parent=11 // pred_check
          %p265 = pneg %p149
        $region30: #{nonlocal_net_flow.1} parent=11 // pred_check_branch
          %267 = sbr.rel (%p265) target = $region32
        $region31: #{nonlocal_net_flow.1} parent=11 // pred_region
          _
        $region32: #{nonlocal_net_flow.1} parent=11 // pred_fallthru
          _
        // Predicated region
        $region33: #{nonlocal_net_flow.1} parent=11 // pred_check
          %p268 = pneg %p170
        $region34: #{nonlocal_net_flow.1} parent=11 // pred_check_branch
          %270 = sbr.rel (%p268) target = $region36
        $region35: #{nonlocal_net_flow.1} parent=11 // pred_region
          _
        $region36: #{nonlocal_net_flow.1} parent=11 // pred_fallthru
          _
        // Predicated region
        $region37: #{nonlocal_net_flow.1} parent=11 // pred_check
          %p271 = pneg %p191
        $region38: #{nonlocal_net_flow.1} parent=11 // pred_check_branch
          %273 = sbr.rel (%p271) target = $region40
        $region39: #{nonlocal_net_flow.1} parent=11 // pred_region
          _
        $region40: #{nonlocal_net_flow.1} parent=11 // pred_fallthru
          _
        // Predicated region
        $region41: #{nonlocal_net_flow.1} parent=11 // pred_check
          %p274 = pneg %p212
        $region42: #{nonlocal_net_flow.1} parent=11 // pred_check_branch
          %276 = sbr.rel (%p274) target = $region44
        $region43: #{nonlocal_net_flow.1} parent=11 // pred_region
          _
        $region44: #{nonlocal_net_flow.1} parent=11 // pred_fallthru
          _
      $region12: #{nonlocal_net_flow.1} parent=5 // pred_fallthru
        _
      %p277 = scmp.lt.s32.totalorder %s18, 2
      // Predicated region
      $region45: #{nonlocal_net_flow.1} parent=5 // pred_check
        %p278 = pneg %p277
      $region46: #{nonlocal_net_flow.1} parent=5 // pred_check_branch
        %280 = sbr.rel (%p278) target = $region48
      $region47: #{nonlocal_net_flow.1} parent=5 // pred_region
        // Predicated region
        $region49: #{nonlocal_net_flow.1} parent=47 // pred_check
          %p281 = pneg %p38
        $region50: #{nonlocal_net_flow.1} parent=47 // pred_check_branch
          %283 = sbr.rel (%p281) target = $region52
        $region51: #{nonlocal_net_flow.1} parent=47 // pred_region
          %p284 = scmp.lt.s32.totalorder %s18, 1
          %s285 = scalar_select %p284, %s18, 1
          %s286 = smul.addr %s285, 8
          %s287 = scalar_lea.vmem %s0, %s286
        $region52: #{nonlocal_net_flow.1} parent=47 // pred_fallthru
          _
      $region48: #{nonlocal_net_flow.1} parent=5 // pred_fallthru
        _
      %p288 = scmp.le.s32.totalorder 1, %s18
      %p289 = scmp.lt.s32.totalorder %s18, 3
      %p290 = pnand %p288, %p289
      %p291 = pneg %p290
      // Predicated region
      $region53: #{nonlocal_net_flow.1} parent=5 // pred_check
        _
      $region54: #{nonlocal_net_flow.1} parent=5 // pred_check_branch
        %293 = sbr.rel (%p290) target = $region56
      $region55: #{nonlocal_net_flow.1} parent=5 // pred_region
        %s294 = ssub.s32 %s18, 1
        %p295 = scmp.lt.s32.totalorder %s23, 1
        %s296 = scalar_select %p295, %s23, 1
        %s297 = smul.addr %s296, 8
        %s298 = scalar_lea.vmem %s0, %s297
        %p299 = pneg %p44
        %p300 = pneg %p41
        %p301 = pneg %p65
        %p302 = pneg %p62
        %p303 = pneg %p86
        %p304 = pneg %p83
        %p305 = pneg %p107
        %p306 = pneg %p104
        %p307 = pneg %p128
        %p308 = pneg %p125
        %p309 = pneg %p149
        %p310 = pneg %p146
        %p311 = pneg %p170
        %p312 = pneg %p167
        %p313 = pneg %p191
        %p314 = pneg %p188
        %p315 = pneg %p212
        %p316 = pneg %p209
        %p317 = pneg %p238
        %p318 = pneg %p235
        %s319 = sand.u32 %s225, 1
        %s320 = scalar_lea.sflag [#allocation3], %s319
        %s321 = sand.u32 %s225, 1
        %s322 = smul.addr %s321, 128
        %s323 = scalar_lea.vmem [#allocation2], %s322
        %p324 = scmp.lt.s32.totalorder %s23, 1
        %s325 = scalar_select %p324, %s23, 1
        %s326 = smul.addr %s325, 8
        %s327 = scalar_lea.vmem %s0, %s326
        %v328 = vld [vmem:[%s7] sm:$0x1]
        %v329 = vld [vmem:[%s7 + $0x1] sm:$0x1]
        %v330 = vld [vmem:[%s7 + $0x2] sm:$0x1]
        %v331 = vld [vmem:[%s7 + $0x3] sm:$0x1]
        %v332 = vld [vmem:[%s7 + $0x4] sm:$0x1]
        %v333 = vld [vmem:[%s7 + $0x5] sm:$0x1]
        %v334 = vld [vmem:[%s7 + $0x6] sm:$0x1]
        %v335 = vld [vmem:[%s7 + $0x7] sm:$0x1]
        %v336 = vld [vmem:[%s327] sm:$0x3f]
        %vm337 = vcmask 1045504
        %v338 = vsel %vm337, %v336, 0.0
        %339 = vadd.xlane.f32.xlu0 %v338
        %v340 = vpop.xlane.xlu0 %339
        %v341 = vmul.f32 %v340, 0.0078125
        %v342 = vsub.f32 %v336, %v341
        %v343 = vld [vmem:[%s1] sm:$0x3f]
        %v344 = vperm.slane %v328, 0
        %345 = vxpose.xlu0.b32.start [1/16] %v342, 128
        %346 = vxpose.xlu0.b32.cont [2/16] 0.0, 128
        %347 = vxpose.xlu0.b32.cont [3/16] 0.0, 128
        %348 = vxpose.xlu0.b32.cont [4/16] 0.0, 128
        %349 = vxpose.xlu0.b32.cont [5/16] 0.0, 128
        %350 = vxpose.xlu0.b32.cont [6/16] 0.0, 128
        %351 = vxpose.xlu0.b32.cont [7/16] 0.0, 128
        %352 = vxpose.xlu0.b32.cont [8/16] 0.0, 128
        %353 = vxpose.xlu0.b32.cont [9/16] 0.0, 128
        %354 = vxpose.xlu0.b32.cont [10/16] 0.0, 128
        %355 = vxpose.xlu0.b32.cont [11/16] 0.0, 128
        %356 = vxpose.xlu0.b32.cont [12/16] 0.0, 128
        %357 = vxpose.xlu0.b32.cont [13/16] 0.0, 128
        %358 = vxpose.xlu0.b32.cont [14/16] 0.0, 128
        %359 = vxpose.xlu0.b32.cont [15/16] 0.0, 128
        %360 = vxpose.xlu0.b32.end [16/16] 0.0, 128
        %v361 = vpop.trf.xlu0
        %v362 = vpop.trf.xlu0
        %v363 = vpop.trf.xlu0
        %v364 = vpop.trf.xlu0
        %v365 = vpop.trf.xlu0
        %v366 = vpop.trf.xlu0
        %v367 = vpop.trf.xlu0
        %v368 = vpop.trf.xlu0
        %v369 = vpop.trf.xlu0
        %v370 = vpop.trf.xlu0
        %v371 = vpop.trf.xlu0
        %v372 = vpop.trf.xlu0
        %v373 = vpop.trf.xlu0
        %v374 = vpop.trf.xlu0
        %v375 = vpop.trf.xlu0
        %v376 = vpop.trf.xlu0
        %vm377 = vcmask 48128
        %v379 = vsel %vm377, %v361, 0
        %v382 = vsel %vm377, %v362, 0
        %v385 = vsel %vm377, %v363, 0
        %v388 = vsel %vm377, %v364, 0
        %v391 = vsel %vm377, %v365, 0
        %v394 = vsel %vm377, %v366, 0
        %v397 = vsel %vm377, %v367, 0
        %v400 = vsel %vm377, %v368, 0
        %v403 = vsel %vm377, %v369, 0
        %v406 = vsel %vm377, %v370, 0
        %v409 = vsel %vm377, %v371, 0
        %v412 = vsel %vm377, %v372, 0
        %v415 = vsel %vm377, %v373, 0
        %v418 = vsel %vm377, %v374, 0
        %v421 = vsel %vm377, %v375, 0
        %v424 = vsel %vm377, %v376, 0
        %v427 = vsel %vm337, %v343, 0
        %429 = vmatpush.msra.mxu0 0.0
        %430 = vmatpush.msra.mxu0 0.0
        %431 = vmatpush.msra.mxu0 0.0
        %432 = vmatpush.msra.mxu0 0.0
        %433 = vmatpush.msra.mxu0 0.0
        %434 = vmatpush.msra.mxu0 0.0
        %435 = vmatpush.msra.mxu0 0.0
        %436 = vmatpush.msra.mxu0 0.0
        %437 = vmatpush.msra.mxu0 0.0
        %438 = vmatpush.msra.mxu0 0.0
        %439 = vmatpush.msra.mxu0 0.0
        %440 = vmatpush.msra.mxu0 0.0
        %441 = vmatpush.msra.mxu0 0.0
        %442 = vmatpush.msra.mxu0 0.0
        %443 = vmatpush.msra.mxu0 0.0
        %444 = vmatpush.msra.mxu0 %v427
        %445 = vmatmul.f32.gmra.mxu0 %v379
        %v446 = vpop.f32.mrf.mxu0
        %v447 = vadd.f32 %v344, %v446
        %448 = vmatmul.f32.gmra.mxu0 %v382
        %v449 = vpop.f32.mrf.mxu0
        %v450 = vadd.f32 %v344, %v449
        %451 = vmatmul.f32.gmra.mxu0 %v385
        %v452 = vpop.f32.mrf.mxu0
        %v453 = vadd.f32 %v344, %v452
        %454 = vmatmul.f32.gmra.mxu0 %v388
        %v455 = vpop.f32.mrf.mxu0
        %v456 = vadd.f32 %v344, %v455
        %457 = vmatmul.f32.gmra.mxu0 %v391
        %v458 = vpop.f32.mrf.mxu0
        %v459 = vadd.f32 %v344, %v458
        %460 = vmatmul.f32.gmra.mxu0 %v394
        %v461 = vpop.f32.mrf.mxu0
        %v462 = vadd.f32 %v344, %v461
        %463 = vmatmul.f32.gmra.mxu0 %v397
        %v464 = vpop.f32.mrf.mxu0
        %v465 = vadd.f32 %v344, %v464
        %466 = vmatmul.f32.gmra.mxu0 %v400
        %v467 = vpop.f32.mrf.mxu0
        %v468 = vadd.f32 %v344, %v467
        %469 = vmatmul.f32.gmra.mxu0 %v403
        %v470 = vpop.f32.mrf.mxu0
        %v471 = vadd.f32 %v344, %v470
        %472 = vmatmul.f32.gmra.mxu0 %v406
        %v473 = vpop.f32.mrf.mxu0
        %v474 = vadd.f32 %v344, %v473
        %475 = vmatmul.f32.gmra.mxu0 %v409
        %v476 = vpop.f32.mrf.mxu0
        %v477 = vadd.f32 %v344, %v476
        %478 = vmatmul.f32.gmra.mxu0 %v412
        %v479 = vpop.f32.mrf.mxu0
        %v480 = vadd.f32 %v344, %v479
        %481 = vmatmul.f32.gmra.mxu0 %v415
        %v482 = vpop.f32.mrf.mxu0
        %v483 = vadd.f32 %v344, %v482
        %484 = vmatmul.f32.gmra.mxu0 %v418
        %v485 = vpop.f32.mrf.mxu0
        %v486 = vadd.f32 %v344, %v485
        %487 = vmatmul.f32.gmra.mxu0 %v421
        %v488 = vpop.f32.mrf.mxu0
        %v489 = vadd.f32 %v344, %v488
        %490 = vmatmul.f32.gmra.mxu0 %v424
        %v491 = vpop.f32.mrf.mxu0
        %v492 = vadd.f32 %v344, %v491
        %493 = vdwg.mxu0
        %v494 = vpack.c.bf16 %v450, %v447
        %v495 = vpack.c.bf16 %v456, %v453
        %v496 = vpack.c.bf16 %v462, %v459
        %v497 = vpack.c.bf16 %v468, %v465
        %v498 = vpack.c.bf16 %v474, %v471
        %v499 = vpack.c.bf16 %v480, %v477
        %v500 = vpack.c.bf16 %v486, %v483
        %v501 = vpack.c.bf16 %v492, %v489
        %v502 = vld [vmem:[%s2] sm:$0xf]
        %v503 = vld [vmem:[%s2 + $0x4] sm:$0xf]
        %v504 = vld [vmem:[%s2 + $0x8] sm:$0xf]
        %v505 = vld [vmem:[%s2 + $0xc] sm:$0xf]
        %v506 = vld [vmem:[%s2 + $0x10] sm:$0xf]
        %v507 = vld [vmem:[%s2 + $0x14] sm:$0xf]
        %v508 = vld [vmem:[%s2 + $0x18] sm:$0xf]
        %v509 = vld [vmem:[%s2 + $0x1c] sm:$0xf]
        %v510 = vld [vmem:[%s2 + $0x20] sm:$0xf]
        %v511 = vld [vmem:[%s2 + $0x24] sm:$0xf]
        %v512 = vld [vmem:[%s2 + $0x28] sm:$0xf]
        %v513 = vld [vmem:[%s2 + $0x2c] sm:$0xf]
        %v514 = vld [vmem:[%s2 + $0x30] sm:$0xf]
        %v515 = vld [vmem:[%s2 + $0x34] sm:$0xf]
        %v516 = vld [vmem:[%s2 + $0x38] sm:$0xf]
        %v517 = vld [vmem:[%s2 + $0x3c] sm:$0xf]
        %v534 = vunpack.c.l.b16 %v502
        %v535 = vunpack.c.l.b16 %v503
        %v536 = vunpack.c.l.b16 %v504
        %v537 = vunpack.c.l.b16 %v505
        %v538 = vunpack.c.l.b16 %v506
        %v539 = vunpack.c.l.b16 %v507
        %v540 = vunpack.c.l.b16 %v508
        %v541 = vunpack.c.l.b16 %v509
        %v542 = vunpack.c.l.b16 %v510
        %v543 = vunpack.c.l.b16 %v511
        %v544 = vunpack.c.l.b16 %v512
        %v545 = vunpack.c.l.b16 %v513
        %v546 = vunpack.c.l.b16 %v514
        %v547 = vunpack.c.l.b16 %v515
        %v548 = vunpack.c.l.b16 %v516
        %v549 = vunpack.c.l.b16 %v517
        %v550 = vpack.c.b16 %v535, %v534
        %v551 = vpack.c.b16 %v537, %v536
        %v552 = vpack.c.b16 %v539, %v538
        %v553 = vpack.c.b16 %v541, %v540
        %v554 = vpack.c.b16 %v543, %v542
        %v555 = vpack.c.b16 %v545, %v544
        %v556 = vpack.c.b16 %v547, %v546
        %v557 = vpack.c.b16 %v549, %v548
        %566 = vmatpush.bf16.msra.mxu0 %v557
        %567 = vmatpush.bf16.msra.mxu0 %v556
        %568 = vmatpush.bf16.msra.mxu0 %v555
        %569 = vmatpush.bf16.msra.mxu0 %v554
        %570 = vmatpush.bf16.msra.mxu0 %v553
        %571 = vmatpush.bf16.msra.mxu0 %v552
        %572 = vmatpush.bf16.msra.mxu0 %v551
        %573 = vmatpush.bf16.msra.mxu0 %v550
        %574 = vmatmul.bf16.gmra.mxu0 %v494
        %v575 = vpop.f32.mrf.mxu0
        %v576 = vadd.f32 0.0, %v575
        %v577 = vpop.f32.mrf.mxu0
        %v578 = vadd.f32 0.0, %v577
        %579 = vmatmul.bf16.gmra.mxu0 %v495
        %v580 = vpop.f32.mrf.mxu0
        %v581 = vadd.f32 0.0, %v580
        %v582 = vpop.f32.mrf.mxu0
        %v583 = vadd.f32 0.0, %v582
        %584 = vmatmul.bf16.gmra.mxu0 %v496
        %v585 = vpop.f32.mrf.mxu0
        %v586 = vadd.f32 0.0, %v585
        %v587 = vpop.f32.mrf.mxu0
        %v588 = vadd.f32 0.0, %v587
        %589 = vmatmul.bf16.gmra.mxu0 %v497
        %v590 = vpop.f32.mrf.mxu0
        %v591 = vadd.f32 0.0, %v590
        %v592 = vpop.f32.mrf.mxu0
        %v593 = vadd.f32 0.0, %v592
        %594 = vmatmul.bf16.gmra.mxu0 %v498
        %v595 = vpop.f32.mrf.mxu0
        %v596 = vadd.f32 0.0, %v595
        %v597 = vpop.f32.mrf.mxu0
        %v598 = vadd.f32 0.0, %v597
        %599 = vmatmul.bf16.gmra.mxu0 %v499
        %v600 = vpop.f32.mrf.mxu0
        %v601 = vadd.f32 0.0, %v600
        %v602 = vpop.f32.mrf.mxu0
        %v603 = vadd.f32 0.0, %v602
        %604 = vmatmul.bf16.gmra.mxu0 %v500
        %v605 = vpop.f32.mrf.mxu0
        %v606 = vadd.f32 0.0, %v605
        %v607 = vpop.f32.mrf.mxu0
        %v608 = vadd.f32 0.0, %v607
        %609 = vmatmul.bf16.gmra.mxu0 %v501
        %v610 = vpop.f32.mrf.mxu0
        %v611 = vadd.f32 0.0, %v610
        %v612 = vpop.f32.mrf.mxu0
        %v613 = vadd.f32 0.0, %v612
        %614 = vdwg.mxu0
        %v615 = vperm.slane %v329, 0
        %v616 = vmul.f32 %v576, %v615
        %v617 = vmul.f32 %v578, %v615
        %v618 = vmul.f32 %v581, %v615
        %v619 = vmul.f32 %v583, %v615
        %v620 = vmul.f32 %v586, %v615
        %v621 = vmul.f32 %v588, %v615
        %v622 = vmul.f32 %v591, %v615
        %v623 = vmul.f32 %v593, %v615
        %v624 = vmul.f32 %v596, %v615
        %v625 = vmul.f32 %v598, %v615
        %v626 = vmul.f32 %v601, %v615
        %v627 = vmul.f32 %v603, %v615
        %v628 = vmul.f32 %v606, %v615
        %v629 = vmul.f32 %v608, %v615
        %v630 = vmul.f32 %v611, %v615
        %v631 = vmul.f32 %v613, %v615
        %v632 = vperm.slane %v330, 0
        %v633 = vadd.f32 %v616, %v632
        %v634 = vadd.f32 %v617, %v632
        %v635 = vadd.f32 %v618, %v632
        %v636 = vadd.f32 %v619, %v632
        %v637 = vadd.f32 %v620, %v632
        %v638 = vadd.f32 %v621, %v632
        %v639 = vadd.f32 %v622, %v632
        %v640 = vadd.f32 %v623, %v632
        %v641 = vadd.f32 %v624, %v632
        %v642 = vadd.f32 %v625, %v632
        %v643 = vadd.f32 %v626, %v632
        %v644 = vadd.f32 %v627, %v632
        %v645 = vadd.f32 %v628, %v632
        %v646 = vadd.f32 %v629, %v632
        %v647 = vadd.f32 %v630, %v632
        %v648 = vadd.f32 %v631, %v632
        %v649 = vmax.f32 %v633, 0.0
        %v650 = vmax.f32 %v634, 0.0
        %v651 = vmax.f32 %v635, 0.0
        %v652 = vmax.f32 %v636, 0.0
        %v653 = vmax.f32 %v637, 0.0
        %v654 = vmax.f32 %v638, 0.0
        %v655 = vmax.f32 %v639, 0.0
        %v656 = vmax.f32 %v640, 0.0
        %v657 = vmax.f32 %v641, 0.0
        %v658 = vmax.f32 %v642, 0.0
        %v659 = vmax.f32 %v643, 0.0
        %v660 = vmax.f32 %v644, 0.0
        %v661 = vmax.f32 %v645, 0.0
        %v662 = vmax.f32 %v646, 0.0
        %v663 = vmax.f32 %v647, 0.0
        %v664 = vmax.f32 %v648, 0.0
        %v665 = vpack.c.bf16 %v650, %v649
        %v666 = vpack.c.bf16 %v652, %v651
        %v667 = vpack.c.bf16 %v654, %v653
        %v668 = vpack.c.bf16 %v656, %v655
        %v669 = vpack.c.bf16 %v658, %v657
        %v670 = vpack.c.bf16 %v660, %v659
        %v671 = vpack.c.bf16 %v662, %v661
        %v672 = vpack.c.bf16 %v664, %v663
        %v673 = vld [vmem:[%s3] sm:$0xff]
        %v674 = vld [vmem:[%s3 + $0x8] sm:$0xf]
        %v675 = vld [vmem:[%s3 + $0xc] sm:$0xff]
        %v676 = vld [vmem:[%s3 + $0x14] sm:$0xf]
        %v677 = vld [vmem:[%s3 + $0x18] sm:$0xff]
        %v678 = vld [vmem:[%s3 + $0x20] sm:$0xf]
        %v679 = vld [vmem:[%s3 + $0x24] sm:$0xff]
        %v680 = vld [vmem:[%s3 + $0x2c] sm:$0xf]
        %v681 = vld [vmem:[%s3 + $0x30] sm:$0xff]
        %v682 = vld [vmem:[%s3 + $0x38] sm:$0xf]
        %v683 = vld [vmem:[%s3 + $0x3c] sm:$0xff]
        %v684 = vld [vmem:[%s3 + $0x44] sm:$0xf]
        %v685 = vld [vmem:[%s3 + $0x48] sm:$0xff]
        %v686 = vld [vmem:[%s3 + $0x50] sm:$0xf]
        %v687 = vld [vmem:[%s3 + $0x54] sm:$0xff]
        %v688 = vld [vmem:[%s3 + $0x5c] sm:$0xf]
        %v689 = vld [vmem:[%s3 + $0x60] sm:$0xff]
        %v690 = vld [vmem:[%s3 + $0x68] sm:$0xf]
        %v691 = vld [vmem:[%s3 + $0x6c] sm:$0xff]
        %v692 = vld [vmem:[%s3 + $0x74] sm:$0xf]
        %v693 = vld [vmem:[%s3 + $0x78] sm:$0xff]
        %v694 = vld [vmem:[%s3 + $0x80] sm:$0xf]
        %v695 = vld [vmem:[%s3 + $0x84] sm:$0xff]
        %v696 = vld [vmem:[%s3 + $0x8c] sm:$0xf]
        %v697 = vld [vmem:[%s3 + $0x90] sm:$0xff]
        %v698 = vld [vmem:[%s3 + $0x98] sm:$0xf]
        %v699 = vld [vmem:[%s3 + $0x9c] sm:$0xff]
        %v700 = vld [vmem:[%s3 + $0xa4] sm:$0xf]
        %v701 = vld [vmem:[%s3 + $0xa8] sm:$0xff]
        %v702 = vld [vmem:[%s3 + $0xb0] sm:$0xf]
        %v703 = vld [vmem:[%s3 + $0xb4] sm:$0xff]
        %v704 = vld [vmem:[%s3 + $0xbc] sm:$0xf]
        %v705 = vld [vmem:[%s8] sm:$0x7]
        %v707 = vperm.slane %v705, 0
        %v708 = vperm.slane %v705, 1
        %v709 = vperm.slane %v705, 2
        %v745 = vunpack.c.l.b16 %v673
        %v746 = vunpack.c.h.b16 %v673
        %v747 = vunpack.c.l.b16 %v674
        %v748 = vunpack.c.l.b16 %v675
        %v749 = vunpack.c.h.b16 %v675
        %v750 = vunpack.c.l.b16 %v676
        %v751 = vunpack.c.l.b16 %v677
        %v752 = vunpack.c.h.b16 %v677
        %v753 = vunpack.c.l.b16 %v678
        %v754 = vunpack.c.l.b16 %v679
        %v755 = vunpack.c.h.b16 %v679
        %v756 = vunpack.c.l.b16 %v680
        %v757 = vunpack.c.l.b16 %v681
        %v758 = vunpack.c.h.b16 %v681
        %v759 = vunpack.c.l.b16 %v682
        %v760 = vunpack.c.l.b16 %v683
        %v761 = vunpack.c.h.b16 %v683
        %v762 = vunpack.c.l.b16 %v684
        %v763 = vunpack.c.l.b16 %v685
        %v764 = vunpack.c.h.b16 %v685
        %v765 = vunpack.c.l.b16 %v686
        %v766 = vunpack.c.l.b16 %v687
        %v767 = vunpack.c.h.b16 %v687
        %v768 = vunpack.c.l.b16 %v688
        %v769 = vunpack.c.l.b16 %v689
        %v770 = vunpack.c.h.b16 %v689
        %v771 = vunpack.c.l.b16 %v690
        %v772 = vunpack.c.l.b16 %v691
        %v773 = vunpack.c.h.b16 %v691
        %v774 = vunpack.c.l.b16 %v692
        %v775 = vunpack.c.l.b16 %v693
        %v776 = vunpack.c.h.b16 %v693
        %v777 = vunpack.c.l.b16 %v694
        %v778 = vunpack.c.l.b16 %v695
        %v779 = vunpack.c.h.b16 %v695
        %v780 = vunpack.c.l.b16 %v696
        %v781 = vunpack.c.l.b16 %v697
        %v782 = vunpack.c.h.b16 %v697
        %v783 = vunpack.c.l.b16 %v698
        %v784 = vunpack.c.l.b16 %v699
        %v785 = vunpack.c.h.b16 %v699
        %v786 = vunpack.c.l.b16 %v700
        %v787 = vunpack.c.l.b16 %v701
        %v788 = vunpack.c.h.b16 %v701
        %v789 = vunpack.c.l.b16 %v702
        %v790 = vunpack.c.l.b16 %v703
        %v791 = vunpack.c.h.b16 %v703
        %v792 = vunpack.c.l.b16 %v704
        %v793 = vpack.c.b16 %v748, %v745
        %v794 = vpack.c.b16 %v749, %v746
        %v795 = vpack.c.b16 %v750, %v747
        %v796 = vpack.c.b16 %v754, %v751
        %v797 = vpack.c.b16 %v755, %v752
        %v798 = vpack.c.b16 %v756, %v753
        %v799 = vpack.c.b16 %v760, %v757
        %v800 = vpack.c.b16 %v761, %v758
        %v801 = vpack.c.b16 %v762, %v759
        %v802 = vpack.c.b16 %v766, %v763
        %v803 = vpack.c.b16 %v767, %v764
        %v804 = vpack.c.b16 %v768, %v765
        %v805 = vpack.c.b16 %v772, %v769
        %v806 = vpack.c.b16 %v773, %v770
        %v807 = vpack.c.b16 %v774, %v771
        %v808 = vpack.c.b16 %v778, %v775
        %v809 = vpack.c.b16 %v779, %v776
        %v810 = vpack.c.b16 %v780, %v777
        %v811 = vpack.c.b16 %v784, %v781
        %v812 = vpack.c.b16 %v785, %v782
        %v813 = vpack.c.b16 %v786, %v783
        %v814 = vpack.c.b16 %v790, %v787
        %v815 = vpack.c.b16 %v791, %v788
        %v816 = vpack.c.b16 %v792, %v789
        %841 = vmatpush.bf16.msra.mxu0 %v814
        %842 = vmatpush.bf16.msra.mxu0 %v811
        %843 = vmatpush.bf16.msra.mxu0 %v808
        %844 = vmatpush.bf16.msra.mxu0 %v805
        %845 = vmatpush.bf16.msra.mxu0 %v802
        %846 = vmatpush.bf16.msra.mxu0 %v799
        %847 = vmatpush.bf16.msra.mxu0 %v796
        %848 = vmatpush.bf16.msra.mxu0 %v793
        %849 = vmatmul.bf16.gmra.mxu0 %v665
        %v850 = vpop.f32.mrf.mxu0
        %v851 = vadd.f32 %v707, %v850
        %v852 = vpop.f32.mrf.mxu0
        %v853 = vadd.f32 %v707, %v852
        %854 = vmatmul.bf16.gmra.mxu0 %v666
        %v855 = vpop.f32.mrf.mxu0
        %v856 = vadd.f32 %v707, %v855
        %v857 = vpop.f32.mrf.mxu0
        %v858 = vadd.f32 %v707, %v857
        %859 = vmatmul.bf16.gmra.mxu0 %v667
        %v860 = vpop.f32.mrf.mxu0
        %v861 = vadd.f32 %v707, %v860
        %v862 = vpop.f32.mrf.mxu0
        %v863 = vadd.f32 %v707, %v862
        %864 = vmatmul.bf16.gmra.mxu0 %v668
        %v865 = vpop.f32.mrf.mxu0
        %v866 = vadd.f32 %v707, %v865
        %v867 = vpop.f32.mrf.mxu0
        %v868 = vadd.f32 %v707, %v867
        %869 = vmatmul.bf16.gmra.mxu0 %v669
        %v870 = vpop.f32.mrf.mxu0
        %v871 = vadd.f32 %v707, %v870
        %v872 = vpop.f32.mrf.mxu0
        %v873 = vadd.f32 %v707, %v872
        %874 = vmatmul.bf16.gmra.mxu0 %v670
        %v875 = vpop.f32.mrf.mxu0
        %v876 = vadd.f32 %v707, %v875
        %v877 = vpop.f32.mrf.mxu0
        %v878 = vadd.f32 %v707, %v877
        %879 = vmatmul.bf16.gmra.mxu0 %v671
        %v880 = vpop.f32.mrf.mxu0
        %v881 = vadd.f32 %v707, %v880
        %v882 = vpop.f32.mrf.mxu0
        %v883 = vadd.f32 %v707, %v882
        %884 = vmatmul.bf16.gmra.mxu0 %v672
        %v885 = vpop.f32.mrf.mxu0
        %v886 = vadd.f32 %v707, %v885
        %v887 = vpop.f32.mrf.mxu0
        %v888 = vadd.f32 %v707, %v887
        %889 = vdwg.mxu0
        %890 = vmatpush.bf16.msra.mxu0 %v815
        %891 = vmatpush.bf16.msra.mxu0 %v812
        %892 = vmatpush.bf16.msra.mxu0 %v809
        %893 = vmatpush.bf16.msra.mxu0 %v806
        %894 = vmatpush.bf16.msra.mxu0 %v803
        %895 = vmatpush.bf16.msra.mxu0 %v800
        %896 = vmatpush.bf16.msra.mxu0 %v797
        %897 = vmatpush.bf16.msra.mxu0 %v794
        %898 = vmatmul.bf16.gmra.mxu0 %v665
        %v899 = vpop.f32.mrf.mxu0
        %v900 = vadd.f32 %v708, %v899
        %v901 = vpop.f32.mrf.mxu0
        %v902 = vadd.f32 %v708, %v901
        %903 = vmatmul.bf16.gmra.mxu0 %v666
        %v904 = vpop.f32.mrf.mxu0
        %v905 = vadd.f32 %v708, %v904
        %v906 = vpop.f32.mrf.mxu0
        %v907 = vadd.f32 %v708, %v906
        %908 = vmatmul.bf16.gmra.mxu0 %v667
        %v909 = vpop.f32.mrf.mxu0
        %v910 = vadd.f32 %v708, %v909
        %v911 = vpop.f32.mrf.mxu0
        %v912 = vadd.f32 %v708, %v911
        %913 = vmatmul.bf16.gmra.mxu0 %v668
        %v914 = vpop.f32.mrf.mxu0
        %v915 = vadd.f32 %v708, %v914
        %v916 = vpop.f32.mrf.mxu0
        %v917 = vadd.f32 %v708, %v916
        %918 = vmatmul.bf16.gmra.mxu0 %v669
        %v919 = vpop.f32.mrf.mxu0
        %v920 = vadd.f32 %v708, %v919
        %v921 = vpop.f32.mrf.mxu0
        %v922 = vadd.f32 %v708, %v921
        %923 = vmatmul.bf16.gmra.mxu0 %v670
        %v924 = vpop.f32.mrf.mxu0
        %v925 = vadd.f32 %v708, %v924
        %v926 = vpop.f32.mrf.mxu0
        %v927 = vadd.f32 %v708, %v926
        %928 = vmatmul.bf16.gmra.mxu0 %v671
        %v929 = vpop.f32.mrf.mxu0
        %v930 = vadd.f32 %v708, %v929
        %v931 = vpop.f32.mrf.mxu0
        %v932 = vadd.f32 %v708, %v931
        %933 = vmatmul.bf16.gmra.mxu0 %v672
        %v934 = vpop.f32.mrf.mxu0
        %v935 = vadd.f32 %v708, %v934
        %v936 = vpop.f32.mrf.mxu0
        %v937 = vadd.f32 %v708, %v936
        %938 = vdwg.mxu0
        %939 = vmatpush.bf16.msra.mxu0 %v816
        %940 = vmatpush.bf16.msra.mxu0 %v813
        %941 = vmatpush.bf16.msra.mxu0 %v810
        %942 = vmatpush.bf16.msra.mxu0 %v807
        %943 = vmatpush.bf16.msra.mxu0 %v804
        %944 = vmatpush.bf16.msra.mxu0 %v801
        %945 = vmatpush.bf16.msra.mxu0 %v798
        %946 = vmatpush.bf16.msra.mxu0 %v795
        %947 = vmatmul.bf16.gmra.mxu0 %v665
        %v948 = vpop.f32.mrf.mxu0
        %v949 = vadd.f32 %v709, %v948
        %v950 = vpop.f32.mrf.mxu0
        %v951 = vadd.f32 %v709, %v950
        %952 = vmatmul.bf16.gmra.mxu0 %v666
        %v953 = vpop.f32.mrf.mxu0
        %v954 = vadd.f32 %v709, %v953
        %v955 = vpop.f32.mrf.mxu0
        %v956 = vadd.f32 %v709, %v955
        %957 = vmatmul.bf16.gmra.mxu0 %v667
        %v958 = vpop.f32.mrf.mxu0
        %v959 = vadd.f32 %v709, %v958
        %v960 = vpop.f32.mrf.mxu0
        %v961 = vadd.f32 %v709, %v960
        %962 = vmatmul.bf16.gmra.mxu0 %v668
        %v963 = vpop.f32.mrf.mxu0
        %v964 = vadd.f32 %v709, %v963
        %v965 = vpop.f32.mrf.mxu0
        %v966 = vadd.f32 %v709, %v965
        %967 = vmatmul.bf16.gmra.mxu0 %v669
        %v968 = vpop.f32.mrf.mxu0
        %v969 = vadd.f32 %v709, %v968
        %v970 = vpop.f32.mrf.mxu0
        %v971 = vadd.f32 %v709, %v970
        %972 = vmatmul.bf16.gmra.mxu0 %v670
        %v973 = vpop.f32.mrf.mxu0
        %v974 = vadd.f32 %v709, %v973
        %v975 = vpop.f32.mrf.mxu0
        %v976 = vadd.f32 %v709, %v975
        %977 = vmatmul.bf16.gmra.mxu0 %v671
        %v978 = vpop.f32.mrf.mxu0
        %v979 = vadd.f32 %v709, %v978
        %v980 = vpop.f32.mrf.mxu0
        %v981 = vadd.f32 %v709, %v980
        %982 = vmatmul.bf16.gmra.mxu0 %v672
        %v983 = vpop.f32.mrf.mxu0
        %v984 = vadd.f32 %v709, %v983
        %v985 = vpop.f32.mrf.mxu0
        %v986 = vadd.f32 %v709, %v985
        %987 = vdwg.mxu0
        %v988 = vpack.c.bf16 %v900, %v851
        %v989 = vpack.c.bf16 %v949, %v949
        %v990 = vpack.c.bf16 %v902, %v853
        %v991 = vpack.c.bf16 %v951, %v951
        %v992 = vpack.c.bf16 %v905, %v856
        %v993 = vpack.c.bf16 %v954, %v954
        %v994 = vpack.c.bf16 %v907, %v858
        %v995 = vpack.c.bf16 %v956, %v956
        %v996 = vpack.c.bf16 %v910, %v861
        %v997 = vpack.c.bf16 %v959, %v959
        %v998 = vpack.c.bf16 %v912, %v863
        %v999 = vpack.c.bf16 %v961, %v961
        %v1000 = vpack.c.bf16 %v915, %v866
        %v1001 = vpack.c.bf16 %v964, %v964
        %v1002 = vpack.c.bf16 %v917, %v868
        %v1003 = vpack.c.bf16 %v966, %v966
        %v1004 = vpack.c.bf16 %v920, %v871
        %v1005 = vpack.c.bf16 %v969, %v969
        %v1006 = vpack.c.bf16 %v922, %v873
        %v1007 = vpack.c.bf16 %v971, %v971
        %v1008 = vpack.c.bf16 %v925, %v876
        %v1009 = vpack.c.bf16 %v974, %v974
        %v1010 = vpack.c.bf16 %v927, %v878
        %v1011 = vpack.c.bf16 %v976, %v976
        %v1012 = vpack.c.bf16 %v930, %v881
        %v1013 = vpack.c.bf16 %v979, %v979
        %v1014 = vpack.c.bf16 %v932, %v883
        %v1015 = vpack.c.bf16 %v981, %v981
        %v1016 = vpack.c.bf16 %v935, %v886
        %v1017 = vpack.c.bf16 %v984, %v984
        %v1018 = vpack.c.bf16 %v937, %v888
        %v1019 = vpack.c.bf16 %v986, %v986
        %vm1020 = vcmask 23552
        %v1021 = vsel %vm1020, %v361, 0
        %v1023 = vsel %vm1020, %v362, 0
        %v1025 = vsel %vm1020, %v363, 0
        %v1027 = vsel %vm1020, %v364, 0
        %v1029 = vsel %vm1020, %v365, 0
        %v1031 = vsel %vm1020, %v366, 0
        %v1033 = vsel %vm1020, %v367, 0
        %v1035 = vsel %vm1020, %v368, 0
        %v1037 = vsel %vm1020, %v369, 0
        %v1039 = vsel %vm1020, %v370, 0
        %v1041 = vsel %vm1020, %v371, 0
        %v1043 = vsel %vm1020, %v372, 0
        %v1045 = vsel %vm1020, %v373, 0
        %v1047 = vsel %vm1020, %v374, 0
        %v1049 = vsel %vm1020, %v375, 0
        %v1051 = vsel %vm1020, %v376, 0
        %vm1053 = vcmask 1042432
        %v1055 = vsel %vm1053, %v342, 0
        %1057 = vmatpush.msra.mxu0 0.0
        %1058 = vmatpush.msra.mxu0 0.0
        %1059 = vmatpush.msra.mxu0 0.0
        %1060 = vmatpush.msra.mxu0 0.0
        %1061 = vmatpush.msra.mxu0 0.0
        %1062 = vmatpush.msra.mxu0 0.0
        %1063 = vmatpush.msra.mxu0 0.0
        %1064 = vmatpush.msra.mxu0 0.0
        %1065 = vmatpush.msra.mxu0 0.0
        %1066 = vmatpush.msra.mxu0 0.0
        %1067 = vmatpush.msra.mxu0 0.0
        %1068 = vmatpush.msra.mxu0 0.0
        %1069 = vmatpush.msra.mxu0 0.0
        %1070 = vmatpush.msra.mxu0 0.0
        %1071 = vmatpush.msra.mxu0 0.0
        %1072 = vmatpush.msra.mxu0 %v1055
        %1073 = vmatmul.f32.gmra.mxu0 %v1021
        %v1074 = vpop.f32.mrf.mxu0
        %v1075 = vadd.f32 0.0, %v1074
        %1076 = vmatmul.f32.gmra.mxu0 %v1023
        %v1077 = vpop.f32.mrf.mxu0
        %v1078 = vadd.f32 0.0, %v1077
        %1079 = vmatmul.f32.gmra.mxu0 %v1025
        %v1080 = vpop.f32.mrf.mxu0
        %v1081 = vadd.f32 0.0, %v1080
        %1082 = vmatmul.f32.gmra.mxu0 %v1027
        %v1083 = vpop.f32.mrf.mxu0
        %v1084 = vadd.f32 0.0, %v1083
        %1085 = vmatmul.f32.gmra.mxu0 %v1029
        %v1086 = vpop.f32.mrf.mxu0
        %v1087 = vadd.f32 0.0, %v1086
        %1088 = vmatmul.f32.gmra.mxu0 %v1031
        %v1089 = vpop.f32.mrf.mxu0
        %v1090 = vadd.f32 0.0, %v1089
        %1091 = vmatmul.f32.gmra.mxu0 %v1033
        %v1092 = vpop.f32.mrf.mxu0
        %v1093 = vadd.f32 0.0, %v1092
        %1094 = vmatmul.f32.gmra.mxu0 %v1035
        %v1095 = vpop.f32.mrf.mxu0
        %v1096 = vadd.f32 0.0, %v1095
        %1097 = vmatmul.f32.gmra.mxu0 %v1037
        %v1098 = vpop.f32.mrf.mxu0
        %v1099 = vadd.f32 0.0, %v1098
        %1100 = vmatmul.f32.gmra.mxu0 %v1039
        %v1101 = vpop.f32.mrf.mxu0
        %v1102 = vadd.f32 0.0, %v1101
        %1103 = vmatmul.f32.gmra.mxu0 %v1041
        %v1104 = vpop.f32.mrf.mxu0
        %v1105 = vadd.f32 0.0, %v1104
        %1106 = vmatmul.f32.gmra.mxu0 %v1043
        %v1107 = vpop.f32.mrf.mxu0
        %v1108 = vadd.f32 0.0, %v1107
        %1109 = vmatmul.f32.gmra.mxu0 %v1045
        %v1110 = vpop.f32.mrf.mxu0
        %v1111 = vadd.f32 0.0, %v1110
        %1112 = vmatmul.f32.gmra.mxu0 %v1047
        %v1113 = vpop.f32.mrf.mxu0
        %v1114 = vadd.f32 0.0, %v1113
        %1115 = vmatmul.f32.gmra.mxu0 %v1049
        %v1116 = vpop.f32.mrf.mxu0
        %v1117 = vadd.f32 0.0, %v1116
        %1118 = vmatmul.f32.gmra.mxu0 %v1051
        %v1119 = vpop.f32.mrf.mxu0
        %v1120 = vadd.f32 0.0, %v1119
        %1121 = vdwg.mxu0
        %v1122 = vmul.f32 %v342, %v342
        %v1123 = vsel %vm1053, %v1122, 0.0
        %v1124 = vrot.slane %v1123, 4
        %v1125 = vadd.f32 %v1123, %v1124
        %v1126 = vrot.slane %v1125, 2
        %v1127 = vadd.f32 %v1125, %v1126
        %v1128 = vrot.slane %v1127, 1
        %v1129 = vadd.f32 %v1127, %v1128
        %1130 = vxpose.xlu0.b32.start [1/16] %v1129, 128
        %1131 = vxpose.xlu0.b32.cont [2/16] 0.0, 128
        %1132 = vxpose.xlu0.b32.cont [3/16] 0.0, 128
        %1133 = vxpose.xlu0.b32.cont [4/16] 0.0, 128
        %1134 = vxpose.xlu0.b32.cont [5/16] 0.0, 128
        %1135 = vxpose.xlu0.b32.cont [6/16] 0.0, 128
        %1136 = vxpose.xlu0.b32.cont [7/16] 0.0, 128
        %1137 = vxpose.xlu0.b32.cont [8/16] 0.0, 128
        %1138 = vxpose.xlu0.b32.cont [9/16] 0.0, 128
        %1139 = vxpose.xlu0.b32.cont [10/16] 0.0, 128
        %1140 = vxpose.xlu0.b32.cont [11/16] 0.0, 128
        %1141 = vxpose.xlu0.b32.cont [12/16] 0.0, 128
        %1142 = vxpose.xlu0.b32.cont [13/16] 0.0, 128
        %1143 = vxpose.xlu0.b32.cont [14/16] 0.0, 128
        %1144 = vxpose.xlu0.b32.cont [15/16] 0.0, 128
        %1145 = vxpose.xlu0.b32.end [16/16] 0.0, 128
        %v1146 = vpop.trf.xlu0
        %v1147 = vpop.trf.xlu0
        %v1148 = vpop.trf.xlu0
        %v1149 = vpop.trf.xlu0
        %v1150 = vpop.trf.xlu0
        %v1151 = vpop.trf.xlu0
        %v1152 = vpop.trf.xlu0
        %v1153 = vpop.trf.xlu0
        %v1154 = vpop.trf.xlu0
        %v1155 = vpop.trf.xlu0
        %v1156 = vpop.trf.xlu0
        %v1157 = vpop.trf.xlu0
        %v1158 = vpop.trf.xlu0
        %v1159 = vpop.trf.xlu0
        %v1160 = vpop.trf.xlu0
        %v1161 = vpop.trf.xlu0
        %1163 = vset.pattern.permute.xlu0 0
        %1164 = vperm.xlu0 %1163, %v1146
        %v1165 = vpop.permute.xlu0 %1164
        %1168 = vset.pattern.permute.xlu0 0
        %1169 = vperm.xlu0 %1168, %v1147
        %v1170 = vpop.permute.xlu0 %1169
        %1173 = vset.pattern.permute.xlu0 0
        %1174 = vperm.xlu0 %1173, %v1148
        %v1175 = vpop.permute.xlu0 %1174
        %1178 = vset.pattern.permute.xlu0 0
        %1179 = vperm.xlu0 %1178, %v1149
        %v1180 = vpop.permute.xlu0 %1179
        %1183 = vset.pattern.permute.xlu0 0
        %1184 = vperm.xlu0 %1183, %v1150
        %v1185 = vpop.permute.xlu0 %1184
        %1188 = vset.pattern.permute.xlu0 0
        %1189 = vperm.xlu0 %1188, %v1151
        %v1190 = vpop.permute.xlu0 %1189
        %1193 = vset.pattern.permute.xlu0 0
        %1194 = vperm.xlu0 %1193, %v1152
        %v1195 = vpop.permute.xlu0 %1194
        %1198 = vset.pattern.permute.xlu0 0
        %1199 = vperm.xlu0 %1198, %v1153
        %v1200 = vpop.permute.xlu0 %1199
        %1203 = vset.pattern.permute.xlu0 0
        %1204 = vperm.xlu0 %1203, %v1154
        %v1205 = vpop.permute.xlu0 %1204
        %1208 = vset.pattern.permute.xlu0 0
        %1209 = vperm.xlu0 %1208, %v1155
        %v1210 = vpop.permute.xlu0 %1209
        %1213 = vset.pattern.permute.xlu0 0
        %1214 = vperm.xlu0 %1213, %v1156
        %v1215 = vpop.permute.xlu0 %1214
        %1218 = vset.pattern.permute.xlu0 0
        %1219 = vperm.xlu0 %1218, %v1157
        %v1220 = vpop.permute.xlu0 %1219
        %1223 = vset.pattern.permute.xlu0 0
        %1224 = vperm.xlu0 %1223, %v1158
        %v1225 = vpop.permute.xlu0 %1224
        %1228 = vset.pattern.permute.xlu0 0
        %1229 = vperm.xlu0 %1228, %v1159
        %v1230 = vpop.permute.xlu0 %1229
        %1233 = vset.pattern.permute.xlu0 0
        %1234 = vperm.xlu0 %1233, %v1160
        %v1235 = vpop.permute.xlu0 %1234
        %1238 = vset.pattern.permute.xlu0 0
        %1239 = vperm.xlu0 %1238, %v1161
        %v1240 = vpop.permute.xlu0 %1239
        %v1242 = vadd.f32 %v1165, %v1129
        %v1243 = vadd.f32 %v1170, %v1129
        %v1244 = vadd.f32 %v1175, %v1129
        %v1245 = vadd.f32 %v1180, %v1129
        %v1246 = vadd.f32 %v1185, %v1129
        %v1247 = vadd.f32 %v1190, %v1129
        %v1248 = vadd.f32 %v1195, %v1129
        %v1249 = vadd.f32 %v1200, %v1129
        %v1250 = vadd.f32 %v1205, %v1129
        %v1251 = vadd.f32 %v1210, %v1129
        %v1252 = vadd.f32 %v1215, %v1129
        %v1253 = vadd.f32 %v1220, %v1129
        %v1254 = vadd.f32 %v1225, %v1129
        %v1255 = vadd.f32 %v1230, %v1129
        %v1256 = vadd.f32 %v1235, %v1129
        %v1257 = vadd.f32 %v1240, %v1129
        %v1258 = vmul.f32 %v1075, 2.0
        %v1259 = vmul.f32 %v1078, 2.0
        %v1260 = vmul.f32 %v1081, 2.0
        %v1261 = vmul.f32 %v1084, 2.0
        %v1262 = vmul.f32 %v1087, 2.0
        %v1263 = vmul.f32 %v1090, 2.0
        %v1264 = vmul.f32 %v1093, 2.0
        %v1265 = vmul.f32 %v1096, 2.0
        %v1266 = vmul.f32 %v1099, 2.0
        %v1267 = vmul.f32 %v1102, 2.0
        %v1268 = vmul.f32 %v1105, 2.0
        %v1269 = vmul.f32 %v1108, 2.0
        %v1270 = vmul.f32 %v1111, 2.0
        %v1271 = vmul.f32 %v1114, 2.0
        %v1272 = vmul.f32 %v1117, 2.0
        %v1273 = vmul.f32 %v1120, 2.0
        %v1274 = vsub.f32 %v1242, %v1258
        %v1275 = vsub.f32 %v1243, %v1259
        %v1276 = vsub.f32 %v1244, %v1260
        %v1277 = vsub.f32 %v1245, %v1261
        %v1278 = vsub.f32 %v1246, %v1262
        %v1279 = vsub.f32 %v1247, %v1263
        %v1280 = vsub.f32 %v1248, %v1264
        %v1281 = vsub.f32 %v1249, %v1265
        %v1282 = vsub.f32 %v1250, %v1266
        %v1283 = vsub.f32 %v1251, %v1267
        %v1284 = vsub.f32 %v1252, %v1268
        %v1285 = vsub.f32 %v1253, %v1269
        %v1286 = vsub.f32 %v1254, %v1270
        %v1287 = vsub.f32 %v1255, %v1271
        %v1288 = vsub.f32 %v1256, %v1272
        %v1289 = vsub.f32 %v1257, %v1273
        %v1290 = vmax.f32 %v1274, 0.0
        %v1291 = vmax.f32 %v1275, 0.0
        %v1292 = vmax.f32 %v1276, 0.0
        %v1293 = vmax.f32 %v1277, 0.0
        %v1294 = vmax.f32 %v1278, 0.0
        %v1295 = vmax.f32 %v1279, 0.0
        %v1296 = vmax.f32 %v1280, 0.0
        %v1297 = vmax.f32 %v1281, 0.0
        %v1298 = vmax.f32 %v1282, 0.0
        %v1299 = vmax.f32 %v1283, 0.0
        %v1300 = vmax.f32 %v1284, 0.0
        %v1301 = vmax.f32 %v1285, 0.0
        %v1302 = vmax.f32 %v1286, 0.0
        %v1303 = vmax.f32 %v1287, 0.0
        %v1304 = vmax.f32 %v1288, 0.0
        %v1305 = vmax.f32 %v1289, 0.0
        %v1306 = vrsqrt.pop %v1290
        %v1307 = vmul.f32 %v1306, %v1290
        %v1308 = vmul.f32 %v1307, %v1306
        %v1309 = vmul.f32 0.5, %v1308
        %v1310 = vsub.f32 1.5, %v1309
        %v1311 = vmul.f32 %v1306, %v1310
        %v1312 = vmul.f32 %v1290, %v1311
        %vm1313 = vcmp.eq.f32.partialorder %v1290, inf
        %v1314 = vsel %vm1313, %v1290, %v1312
        %vm1315 = vcmp.eq.f32.partialorder %v1290, 0.0
        %v1316 = vand.u32 %v1290, 2147483648
        %v1317 = vsel %vm1315, %v1316, %v1314
        %v1318 = vrsqrt.pop %v1291
        %v1319 = vmul.f32 %v1318, %v1291
        %v1320 = vmul.f32 %v1319, %v1318
        %v1321 = vmul.f32 0.5, %v1320
        %v1322 = vsub.f32 1.5, %v1321
        %v1323 = vmul.f32 %v1318, %v1322
        %v1324 = vmul.f32 %v1291, %v1323
        %vm1325 = vcmp.eq.f32.partialorder %v1291, inf
        %v1326 = vsel %vm1325, %v1291, %v1324
        %vm1327 = vcmp.eq.f32.partialorder %v1291, 0.0
        %v1328 = vand.u32 %v1291, 2147483648
        %v1329 = vsel %vm1327, %v1328, %v1326
        %v1330 = vrsqrt.pop %v1292
        %v1331 = vmul.f32 %v1330, %v1292
        %v1332 = vmul.f32 %v1331, %v1330
        %v1333 = vmul.f32 0.5, %v1332
        %v1334 = vsub.f32 1.5, %v1333
        %v1335 = vmul.f32 %v1330, %v1334
        %v1336 = vmul.f32 %v1292, %v1335
        %vm1337 = vcmp.eq.f32.partialorder %v1292, inf
        %v1338 = vsel %vm1337, %v1292, %v1336
        %vm1339 = vcmp.eq.f32.partialorder %v1292, 0.0
        %v1340 = vand.u32 %v1292, 2147483648
        %v1341 = vsel %vm1339, %v1340, %v1338
        %v1342 = vrsqrt.pop %v1293
        %v1343 = vmul.f32 %v1342, %v1293
        %v1344 = vmul.f32 %v1343, %v1342
        %v1345 = vmul.f32 0.5, %v1344
        %v1346 = vsub.f32 1.5, %v1345
        %v1347 = vmul.f32 %v1342, %v1346
        %v1348 = vmul.f32 %v1293, %v1347
        %vm1349 = vcmp.eq.f32.partialorder %v1293, inf
        %v1350 = vsel %vm1349, %v1293, %v1348
        %vm1351 = vcmp.eq.f32.partialorder %v1293, 0.0
        %v1352 = vand.u32 %v1293, 2147483648
        %v1353 = vsel %vm1351, %v1352, %v1350
        %v1354 = vrsqrt.pop %v1294
        %v1355 = vmul.f32 %v1354, %v1294
        %v1356 = vmul.f32 %v1355, %v1354
        %v1357 = vmul.f32 0.5, %v1356
        %v1358 = vsub.f32 1.5, %v1357
        %v1359 = vmul.f32 %v1354, %v1358
        %v1360 = vmul.f32 %v1294, %v1359
        %vm1361 = vcmp.eq.f32.partialorder %v1294, inf
        %v1362 = vsel %vm1361, %v1294, %v1360
        %vm1363 = vcmp.eq.f32.partialorder %v1294, 0.0
        %v1364 = vand.u32 %v1294, 2147483648
        %v1365 = vsel %vm1363, %v1364, %v1362
        %v1366 = vrsqrt.pop %v1295
        %v1367 = vmul.f32 %v1366, %v1295
        %v1368 = vmul.f32 %v1367, %v1366
        %v1369 = vmul.f32 0.5, %v1368
        %v1370 = vsub.f32 1.5, %v1369
        %v1371 = vmul.f32 %v1366, %v1370
        %v1372 = vmul.f32 %v1295, %v1371
        %vm1373 = vcmp.eq.f32.partialorder %v1295, inf
        %v1374 = vsel %vm1373, %v1295, %v1372
        %vm1375 = vcmp.eq.f32.partialorder %v1295, 0.0
        %v1376 = vand.u32 %v1295, 2147483648
        %v1377 = vsel %vm1375, %v1376, %v1374
        %v1378 = vrsqrt.pop %v1296
        %v1379 = vmul.f32 %v1378, %v1296
        %v1380 = vmul.f32 %v1379, %v1378
        %v1381 = vmul.f32 0.5, %v1380
        %v1382 = vsub.f32 1.5, %v1381
        %v1383 = vmul.f32 %v1378, %v1382
        %v1384 = vmul.f32 %v1296, %v1383
        %vm1385 = vcmp.eq.f32.partialorder %v1296, inf
        %v1386 = vsel %vm1385, %v1296, %v1384
        %vm1387 = vcmp.eq.f32.partialorder %v1296, 0.0
        %v1388 = vand.u32 %v1296, 2147483648
        %v1389 = vsel %vm1387, %v1388, %v1386
        %v1390 = vrsqrt.pop %v1297
        %v1391 = vmul.f32 %v1390, %v1297
        %v1392 = vmul.f32 %v1391, %v1390
        %v1393 = vmul.f32 0.5, %v1392
        %v1394 = vsub.f32 1.5, %v1393
        %v1395 = vmul.f32 %v1390, %v1394
        %v1396 = vmul.f32 %v1297, %v1395
        %vm1397 = vcmp.eq.f32.partialorder %v1297, inf
        %v1398 = vsel %vm1397, %v1297, %v1396
        %vm1399 = vcmp.eq.f32.partialorder %v1297, 0.0
        %v1400 = vand.u32 %v1297, 2147483648
        %v1401 = vsel %vm1399, %v1400, %v1398
        %v1402 = vrsqrt.pop %v1298
        %v1403 = vmul.f32 %v1402, %v1298
        %v1404 = vmul.f32 %v1403, %v1402
        %v1405 = vmul.f32 0.5, %v1404
        %v1406 = vsub.f32 1.5, %v1405
        %v1407 = vmul.f32 %v1402, %v1406
        %v1408 = vmul.f32 %v1298, %v1407
        %vm1409 = vcmp.eq.f32.partialorder %v1298, inf
        %v1410 = vsel %vm1409, %v1298, %v1408
        %vm1411 = vcmp.eq.f32.partialorder %v1298, 0.0
        %v1412 = vand.u32 %v1298, 2147483648
        %v1413 = vsel %vm1411, %v1412, %v1410
        %v1414 = vrsqrt.pop %v1299
        %v1415 = vmul.f32 %v1414, %v1299
        %v1416 = vmul.f32 %v1415, %v1414
        %v1417 = vmul.f32 0.5, %v1416
        %v1418 = vsub.f32 1.5, %v1417
        %v1419 = vmul.f32 %v1414, %v1418
        %v1420 = vmul.f32 %v1299, %v1419
        %vm1421 = vcmp.eq.f32.partialorder %v1299, inf
        %v1422 = vsel %vm1421, %v1299, %v1420
        %vm1423 = vcmp.eq.f32.partialorder %v1299, 0.0
        %v1424 = vand.u32 %v1299, 2147483648
        %v1425 = vsel %vm1423, %v1424, %v1422
        %v1426 = vrsqrt.pop %v1300
        %v1427 = vmul.f32 %v1426, %v1300
        %v1428 = vmul.f32 %v1427, %v1426
        %v1429 = vmul.f32 0.5, %v1428
        %v1430 = vsub.f32 1.5, %v1429
        %v1431 = vmul.f32 %v1426, %v1430
        %v1432 = vmul.f32 %v1300, %v1431
        %vm1433 = vcmp.eq.f32.partialorder %v1300, inf
        %v1434 = vsel %vm1433, %v1300, %v1432
        %vm1435 = vcmp.eq.f32.partialorder %v1300, 0.0
        %v1436 = vand.u32 %v1300, 2147483648
        %v1437 = vsel %vm1435, %v1436, %v1434
        %v1438 = vrsqrt.pop %v1301
        %v1439 = vmul.f32 %v1438, %v1301
        %v1440 = vmul.f32 %v1439, %v1438
        %v1441 = vmul.f32 0.5, %v1440
        %v1442 = vsub.f32 1.5, %v1441
        %v1443 = vmul.f32 %v1438, %v1442
        %v1444 = vmul.f32 %v1301, %v1443
        %vm1445 = vcmp.eq.f32.partialorder %v1301, inf
        %v1446 = vsel %vm1445, %v1301, %v1444
        %vm1447 = vcmp.eq.f32.partialorder %v1301, 0.0
        %v1448 = vand.u32 %v1301, 2147483648
        %v1449 = vsel %vm1447, %v1448, %v1446
        %v1450 = vrsqrt.pop %v1302
        %v1451 = vmul.f32 %v1450, %v1302
        %v1452 = vmul.f32 %v1451, %v1450
        %v1453 = vmul.f32 0.5, %v1452
        %v1454 = vsub.f32 1.5, %v1453
        %v1455 = vmul.f32 %v1450, %v1454
        %v1456 = vmul.f32 %v1302, %v1455
        %vm1457 = vcmp.eq.f32.partialorder %v1302, inf
        %v1458 = vsel %vm1457, %v1302, %v1456
        %vm1459 = vcmp.eq.f32.partialorder %v1302, 0.0
        %v1460 = vand.u32 %v1302, 2147483648
        %v1461 = vsel %vm1459, %v1460, %v1458
        %v1462 = vrsqrt.pop %v1303
        %v1463 = vmul.f32 %v1462, %v1303
        %v1464 = vmul.f32 %v1463, %v1462
        %v1465 = vmul.f32 0.5, %v1464
        %v1466 = vsub.f32 1.5, %v1465
        %v1467 = vmul.f32 %v1462, %v1466
        %v1468 = vmul.f32 %v1303, %v1467
        %vm1469 = vcmp.eq.f32.partialorder %v1303, inf
        %v1470 = vsel %vm1469, %v1303, %v1468
        %vm1471 = vcmp.eq.f32.partialorder %v1303, 0.0
        %v1472 = vand.u32 %v1303, 2147483648
        %v1473 = vsel %vm1471, %v1472, %v1470
        %v1474 = vrsqrt.pop %v1304
        %v1475 = vmul.f32 %v1474, %v1304
        %v1476 = vmul.f32 %v1475, %v1474
        %v1477 = vmul.f32 0.5, %v1476
        %v1478 = vsub.f32 1.5, %v1477
        %v1479 = vmul.f32 %v1474, %v1478
        %v1480 = vmul.f32 %v1304, %v1479
        %vm1481 = vcmp.eq.f32.partialorder %v1304, inf
        %v1482 = vsel %vm1481, %v1304, %v1480
        %vm1483 = vcmp.eq.f32.partialorder %v1304, 0.0
        %v1484 = vand.u32 %v1304, 2147483648
        %v1485 = vsel %vm1483, %v1484, %v1482
        %v1486 = vrsqrt.pop %v1305
        %v1487 = vmul.f32 %v1486, %v1305
        %v1488 = vmul.f32 %v1487, %v1486
        %v1489 = vmul.f32 0.5, %v1488
        %v1490 = vsub.f32 1.5, %v1489
        %v1491 = vmul.f32 %v1486, %v1490
        %v1492 = vmul.f32 %v1305, %v1491
        %vm1493 = vcmp.eq.f32.partialorder %v1305, inf
        %v1494 = vsel %vm1493, %v1305, %v1492
        %vm1495 = vcmp.eq.f32.partialorder %v1305, 0.0
        %v1496 = vand.u32 %v1305, 2147483648
        %v1497 = vsel %vm1495, %v1496, %v1494
        %v1498 = vrot.slane %v342, 3
        %1500 = vxpose.xlu0.b32.start [1/16] %v1498, 128
        %1501 = vxpose.xlu0.b32.cont [2/16] 0.0, 128
        %1502 = vxpose.xlu0.b32.cont [3/16] 0.0, 128
        %1503 = vxpose.xlu0.b32.cont [4/16] 0.0, 128
        %1504 = vxpose.xlu0.b32.cont [5/16] 0.0, 128
        %1505 = vxpose.xlu0.b32.cont [6/16] 0.0, 128
        %1506 = vxpose.xlu0.b32.cont [7/16] 0.0, 128
        %1507 = vxpose.xlu0.b32.cont [8/16] 0.0, 128
        %1508 = vxpose.xlu0.b32.cont [9/16] 0.0, 128
        %1509 = vxpose.xlu0.b32.cont [10/16] 0.0, 128
        %1510 = vxpose.xlu0.b32.cont [11/16] 0.0, 128
        %1511 = vxpose.xlu0.b32.cont [12/16] 0.0, 128
        %1512 = vxpose.xlu0.b32.cont [13/16] 0.0, 128
        %1513 = vxpose.xlu0.b32.cont [14/16] 0.0, 128
        %1514 = vxpose.xlu0.b32.cont [15/16] 0.0, 128
        %1515 = vxpose.xlu0.b32.end [16/16] 0.0, 128
        %v1516 = vpop.trf.xlu0
        %v1517 = vpop.trf.xlu0
        %v1518 = vpop.trf.xlu0
        %v1519 = vpop.trf.xlu0
        %v1520 = vpop.trf.xlu0
        %v1521 = vpop.trf.xlu0
        %v1522 = vpop.trf.xlu0
        %v1523 = vpop.trf.xlu0
        %v1524 = vpop.trf.xlu0
        %v1525 = vpop.trf.xlu0
        %v1526 = vpop.trf.xlu0
        %v1527 = vpop.trf.xlu0
        %v1528 = vpop.trf.xlu0
        %v1529 = vpop.trf.xlu0
        %v1530 = vpop.trf.xlu0
        %v1531 = vpop.trf.xlu0
        %v1533 = vsel %vm1020, %v1516, 0
        %v1536 = vsel %vm1020, %v1517, 0
        %v1539 = vsel %vm1020, %v1518, 0
        %v1542 = vsel %vm1020, %v1519, 0
        %v1545 = vsel %vm1020, %v1520, 0
        %v1548 = vsel %vm1020, %v1521, 0
        %v1551 = vsel %vm1020, %v1522, 0
        %v1554 = vsel %vm1020, %v1523, 0
        %v1557 = vsel %vm1020, %v1524, 0
        %v1560 = vsel %vm1020, %v1525, 0
        %v1563 = vsel %vm1020, %v1526, 0
        %v1566 = vsel %vm1020, %v1527, 0
        %v1569 = vsel %vm1020, %v1528, 0
        %v1572 = vsel %vm1020, %v1529, 0
        %v1575 = vsel %vm1020, %v1530, 0
        %v1578 = vsel %vm1020, %v1531, 0
        %v1580 = vsel %vm1053, %v1498, 0
        %1582 = vmatpush.msra.mxu0 0.0
        %1583 = vmatpush.msra.mxu0 0.0
        %1584 = vmatpush.msra.mxu0 0.0
        %1585 = vmatpush.msra.mxu0 0.0
        %1586 = vmatpush.msra.mxu0 0.0
        %1587 = vmatpush.msra.mxu0 0.0
        %1588 = vmatpush.msra.mxu0 0.0
        %1589 = vmatpush.msra.mxu0 0.0
        %1590 = vmatpush.msra.mxu0 0.0
        %1591 = vmatpush.msra.mxu0 0.0
        %1592 = vmatpush.msra.mxu0 0.0
        %1593 = vmatpush.msra.mxu0 0.0
        %1594 = vmatpush.msra.mxu0 0.0
        %1595 = vmatpush.msra.mxu0 0.0
        %1596 = vmatpush.msra.mxu0 0.0
        %1597 = vmatpush.msra.mxu0 %v1580
        %1598 = vmatmul.f32.gmra.mxu0 %v1533
        %v1599 = vpop.f32.mrf.mxu0
        %v1600 = vadd.f32 0.0, %v1599
        %1601 = vmatmul.f32.gmra.mxu0 %v1536
        %v1602 = vpop.f32.mrf.mxu0
        %v1603 = vadd.f32 0.0, %v1602
        %1604 = vmatmul.f32.gmra.mxu0 %v1539
        %v1605 = vpop.f32.mrf.mxu0
        %v1606 = vadd.f32 0.0, %v1605
        %1607 = vmatmul.f32.gmra.mxu0 %v1542
        %v1608 = vpop.f32.mrf.mxu0
        %v1609 = vadd.f32 0.0, %v1608
        %1610 = vmatmul.f32.gmra.mxu0 %v1545
        %v1611 = vpop.f32.mrf.mxu0
        %v1612 = vadd.f32 0.0, %v1611
        %1613 = vmatmul.f32.gmra.mxu0 %v1548
        %v1614 = vpop.f32.mrf.mxu0
        %v1615 = vadd.f32 0.0, %v1614
        %1616 = vmatmul.f32.gmra.mxu0 %v1551
        %v1617 = vpop.f32.mrf.mxu0
        %v1618 = vadd.f32 0.0, %v1617
        %1619 = vmatmul.f32.gmra.mxu0 %v1554
        %v1620 = vpop.f32.mrf.mxu0
        %v1621 = vadd.f32 0.0, %v1620
        %1622 = vmatmul.f32.gmra.mxu0 %v1557
        %v1623 = vpop.f32.mrf.mxu0
        %v1624 = vadd.f32 0.0, %v1623
        %1625 = vmatmul.f32.gmra.mxu0 %v1560
        %v1626 = vpop.f32.mrf.mxu0
        %v1627 = vadd.f32 0.0, %v1626
        %1628 = vmatmul.f32.gmra.mxu0 %v1563
        %v1629 = vpop.f32.mrf.mxu0
        %v1630 = vadd.f32 0.0, %v1629
        %1631 = vmatmul.f32.gmra.mxu0 %v1566
        %v1632 = vpop.f32.mrf.mxu0
        %v1633 = vadd.f32 0.0, %v1632
        %1634 = vmatmul.f32.gmra.mxu0 %v1569
        %v1635 = vpop.f32.mrf.mxu0
        %v1636 = vadd.f32 0.0, %v1635
        %1637 = vmatmul.f32.gmra.mxu0 %v1572
        %v1638 = vpop.f32.mrf.mxu0
        %v1639 = vadd.f32 0.0, %v1638
        %1640 = vmatmul.f32.gmra.mxu0 %v1575
        %v1641 = vpop.f32.mrf.mxu0
        %v1642 = vadd.f32 0.0, %v1641
        %1643 = vmatmul.f32.gmra.mxu0 %v1578
        %v1644 = vpop.f32.mrf.mxu0
        %v1645 = vadd.f32 0.0, %v1644
        %1646 = vdwg.mxu0
        %v1648 = vrot.slane %v1122, 3
        %v1650 = vsel %vm1053, %v1648, 0.0
        %v1651 = vrot.slane %v1650, 4
        %v1652 = vadd.f32 %v1650, %v1651
        %v1653 = vrot.slane %v1652, 2
        %v1654 = vadd.f32 %v1652, %v1653
        %v1655 = vrot.slane %v1654, 1
        %v1656 = vadd.f32 %v1654, %v1655
        %1657 = vxpose.xlu0.b32.start [1/16] %v1656, 128
        %1658 = vxpose.xlu0.b32.cont [2/16] 0.0, 128
        %1659 = vxpose.xlu0.b32.cont [3/16] 0.0, 128
        %1660 = vxpose.xlu0.b32.cont [4/16] 0.0, 128
        %1661 = vxpose.xlu0.b32.cont [5/16] 0.0, 128
        %1662 = vxpose.xlu0.b32.cont [6/16] 0.0, 128
        %1663 = vxpose.xlu0.b32.cont [7/16] 0.0, 128
        %1664 = vxpose.xlu0.b32.cont [8/16] 0.0, 128
        %1665 = vxpose.xlu0.b32.cont [9/16] 0.0, 128
        %1666 = vxpose.xlu0.b32.cont [10/16] 0.0, 128
        %1667 = vxpose.xlu0.b32.cont [11/16] 0.0, 128
        %1668 = vxpose.xlu0.b32.cont [12/16] 0.0, 128
        %1669 = vxpose.xlu0.b32.cont [13/16] 0.0, 128
        %1670 = vxpose.xlu0.b32.cont [14/16] 0.0, 128
        %1671 = vxpose.xlu0.b32.cont [15/16] 0.0, 128
        %1672 = vxpose.xlu0.b32.end [16/16] 0.0, 128
        %v1673 = vpop.trf.xlu0
        %v1674 = vpop.trf.xlu0
        %v1675 = vpop.trf.xlu0
        %v1676 = vpop.trf.xlu0
        %v1677 = vpop.trf.xlu0
        %v1678 = vpop.trf.xlu0
        %v1679 = vpop.trf.xlu0
        %v1680 = vpop.trf.xlu0
        %v1681 = vpop.trf.xlu0
        %v1682 = vpop.trf.xlu0
        %v1683 = vpop.trf.xlu0
        %v1684 = vpop.trf.xlu0
        %v1685 = vpop.trf.xlu0
        %v1686 = vpop.trf.xlu0
        %v1687 = vpop.trf.xlu0
        %v1688 = vpop.trf.xlu0
        %1690 = vset.pattern.permute.xlu0 0
        %1691 = vperm.xlu0 %1690, %v1673
        %v1692 = vpop.permute.xlu0 %1691
        %1695 = vset.pattern.permute.xlu0 0
        %1696 = vperm.xlu0 %1695, %v1674
        %v1697 = vpop.permute.xlu0 %1696
        %1700 = vset.pattern.permute.xlu0 0
        %1701 = vperm.xlu0 %1700, %v1675
        %v1702 = vpop.permute.xlu0 %1701
        %1705 = vset.pattern.permute.xlu0 0
        %1706 = vperm.xlu0 %1705, %v1676
        %v1707 = vpop.permute.xlu0 %1706
        %1710 = vset.pattern.permute.xlu0 0
        %1711 = vperm.xlu0 %1710, %v1677
        %v1712 = vpop.permute.xlu0 %1711
        %1715 = vset.pattern.permute.xlu0 0
        %1716 = vperm.xlu0 %1715, %v1678
        %v1717 = vpop.permute.xlu0 %1716
        %1720 = vset.pattern.permute.xlu0 0
        %1721 = vperm.xlu0 %1720, %v1679
        %v1722 = vpop.permute.xlu0 %1721
        %1725 = vset.pattern.permute.xlu0 0
        %1726 = vperm.xlu0 %1725, %v1680
        %v1727 = vpop.permute.xlu0 %1726
        %1730 = vset.pattern.permute.xlu0 0
        %1731 = vperm.xlu0 %1730, %v1681
        %v1732 = vpop.permute.xlu0 %1731
        %1735 = vset.pattern.permute.xlu0 0
        %1736 = vperm.xlu0 %1735, %v1682
        %v1737 = vpop.permute.xlu0 %1736
        %1740 = vset.pattern.permute.xlu0 0
        %1741 = vperm.xlu0 %1740, %v1683
        %v1742 = vpop.permute.xlu0 %1741
        %1745 = vset.pattern.permute.xlu0 0
        %1746 = vperm.xlu0 %1745, %v1684
        %v1747 = vpop.permute.xlu0 %1746
        %1750 = vset.pattern.permute.xlu0 0
        %1751 = vperm.xlu0 %1750, %v1685
        %v1752 = vpop.permute.xlu0 %1751
        %1755 = vset.pattern.permute.xlu0 0
        %1756 = vperm.xlu0 %1755, %v1686
        %v1757 = vpop.permute.xlu0 %1756
        %1760 = vset.pattern.permute.xlu0 0
        %1761 = vperm.xlu0 %1760, %v1687
        %v1762 = vpop.permute.xlu0 %1761
        %1765 = vset.pattern.permute.xlu0 0
        %1766 = vperm.xlu0 %1765, %v1688
        %v1767 = vpop.permute.xlu0 %1766
        %v1769 = vadd.f32 %v1692, %v1656
        %v1770 = vadd.f32 %v1697, %v1656
        %v1771 = vadd.f32 %v1702, %v1656
        %v1772 = vadd.f32 %v1707, %v1656
        %v1773 = vadd.f32 %v1712, %v1656
        %v1774 = vadd.f32 %v1717, %v1656
        %v1775 = vadd.f32 %v1722, %v1656
        %v1776 = vadd.f32 %v1727, %v1656
        %v1777 = vadd.f32 %v1732, %v1656
        %v1778 = vadd.f32 %v1737, %v1656
        %v1779 = vadd.f32 %v1742, %v1656
        %v1780 = vadd.f32 %v1747, %v1656
        %v1781 = vadd.f32 %v1752, %v1656
        %v1782 = vadd.f32 %v1757, %v1656
        %v1783 = vadd.f32 %v1762, %v1656
        %v1784 = vadd.f32 %v1767, %v1656
        %v1785 = vmul.f32 %v1600, 2.0
        %v1786 = vmul.f32 %v1603, 2.0
        %v1787 = vmul.f32 %v1606, 2.0
        %v1788 = vmul.f32 %v1609, 2.0
        %v1789 = vmul.f32 %v1612, 2.0
        %v1790 = vmul.f32 %v1615, 2.0
        %v1791 = vmul.f32 %v1618, 2.0
        %v1792 = vmul.f32 %v1621, 2.0
        %v1793 = vmul.f32 %v1624, 2.0
        %v1794 = vmul.f32 %v1627, 2.0
        %v1795 = vmul.f32 %v1630, 2.0
        %v1796 = vmul.f32 %v1633, 2.0
        %v1797 = vmul.f32 %v1636, 2.0
        %v1798 = vmul.f32 %v1639, 2.0
        %v1799 = vmul.f32 %v1642, 2.0
        %v1800 = vmul.f32 %v1645, 2.0
        %v1801 = vsub.f32 %v1769, %v1785
        %v1802 = vsub.f32 %v1770, %v1786
        %v1803 = vsub.f32 %v1771, %v1787
        %v1804 = vsub.f32 %v1772, %v1788
        %v1805 = vsub.f32 %v1773, %v1789
        %v1806 = vsub.f32 %v1774, %v1790
        %v1807 = vsub.f32 %v1775, %v1791
        %v1808 = vsub.f32 %v1776, %v1792
        %v1809 = vsub.f32 %v1777, %v1793
        %v1810 = vsub.f32 %v1778, %v1794
        %v1811 = vsub.f32 %v1779, %v1795
        %v1812 = vsub.f32 %v1780, %v1796
        %v1813 = vsub.f32 %v1781, %v1797
        %v1814 = vsub.f32 %v1782, %v1798
        %v1815 = vsub.f32 %v1783, %v1799
        %v1816 = vsub.f32 %v1784, %v1800
        %v1817 = vmax.f32 %v1801, 0.0
        %v1818 = vmax.f32 %v1802, 0.0
        %v1819 = vmax.f32 %v1803, 0.0
        %v1820 = vmax.f32 %v1804, 0.0
        %v1821 = vmax.f32 %v1805, 0.0
        %v1822 = vmax.f32 %v1806, 0.0
        %v1823 = vmax.f32 %v1807, 0.0
        %v1824 = vmax.f32 %v1808, 0.0
        %v1825 = vmax.f32 %v1809, 0.0
        %v1826 = vmax.f32 %v1810, 0.0
        %v1827 = vmax.f32 %v1811, 0.0
        %v1828 = vmax.f32 %v1812, 0.0
        %v1829 = vmax.f32 %v1813, 0.0
        %v1830 = vmax.f32 %v1814, 0.0
        %v1831 = vmax.f32 %v1815, 0.0
        %v1832 = vmax.f32 %v1816, 0.0
        %v1833 = vrsqrt.pop %v1817
        %v1834 = vmul.f32 %v1833, %v1817
        %v1835 = vmul.f32 %v1834, %v1833
        %v1836 = vmul.f32 0.5, %v1835
        %v1837 = vsub.f32 1.5, %v1836
        %v1838 = vmul.f32 %v1833, %v1837
        %v1839 = vmul.f32 %v1817, %v1838
        %vm1840 = vcmp.eq.f32.partialorder %v1817, inf
        %v1841 = vsel %vm1840, %v1817, %v1839
        %vm1842 = vcmp.eq.f32.partialorder %v1817, 0.0
        %v1843 = vand.u32 %v1817, 2147483648
        %v1844 = vsel %vm1842, %v1843, %v1841
        %v1845 = vrsqrt.pop %v1818
        %v1846 = vmul.f32 %v1845, %v1818
        %v1847 = vmul.f32 %v1846, %v1845
        %v1848 = vmul.f32 0.5, %v1847
        %v1849 = vsub.f32 1.5, %v1848
        %v1850 = vmul.f32 %v1845, %v1849
        %v1851 = vmul.f32 %v1818, %v1850
        %vm1852 = vcmp.eq.f32.partialorder %v1818, inf
        %v1853 = vsel %vm1852, %v1818, %v1851
        %vm1854 = vcmp.eq.f32.partialorder %v1818, 0.0
        %v1855 = vand.u32 %v1818, 2147483648
        %v1856 = vsel %vm1854, %v1855, %v1853
        %v1857 = vrsqrt.pop %v1819
        %v1858 = vmul.f32 %v1857, %v1819
        %v1859 = vmul.f32 %v1858, %v1857
        %v1860 = vmul.f32 0.5, %v1859
        %v1861 = vsub.f32 1.5, %v1860
        %v1862 = vmul.f32 %v1857, %v1861
        %v1863 = vmul.f32 %v1819, %v1862
        %vm1864 = vcmp.eq.f32.partialorder %v1819, inf
        %v1865 = vsel %vm1864, %v1819, %v1863
        %vm1866 = vcmp.eq.f32.partialorder %v1819, 0.0
        %v1867 = vand.u32 %v1819, 2147483648
        %v1868 = vsel %vm1866, %v1867, %v1865
        %v1869 = vrsqrt.pop %v1820
        %v1870 = vmul.f32 %v1869, %v1820
        %v1871 = vmul.f32 %v1870, %v1869
        %v1872 = vmul.f32 0.5, %v1871
        %v1873 = vsub.f32 1.5, %v1872
        %v1874 = vmul.f32 %v1869, %v1873
        %v1875 = vmul.f32 %v1820, %v1874
        %vm1876 = vcmp.eq.f32.partialorder %v1820, inf
        %v1877 = vsel %vm1876, %v1820, %v1875
        %vm1878 = vcmp.eq.f32.partialorder %v1820, 0.0
        %v1879 = vand.u32 %v1820, 2147483648
        %v1880 = vsel %vm1878, %v1879, %v1877
        %v1881 = vrsqrt.pop %v1821
        %v1882 = vmul.f32 %v1881, %v1821
        %v1883 = vmul.f32 %v1882, %v1881
        %v1884 = vmul.f32 0.5, %v1883
        %v1885 = vsub.f32 1.5, %v1884
        %v1886 = vmul.f32 %v1881, %v1885
        %v1887 = vmul.f32 %v1821, %v1886
        %vm1888 = vcmp.eq.f32.partialorder %v1821, inf
        %v1889 = vsel %vm1888, %v1821, %v1887
        %vm1890 = vcmp.eq.f32.partialorder %v1821, 0.0
        %v1891 = vand.u32 %v1821, 2147483648
        %v1892 = vsel %vm1890, %v1891, %v1889
        %v1893 = vrsqrt.pop %v1822
        %v1894 = vmul.f32 %v1893, %v1822
        %v1895 = vmul.f32 %v1894, %v1893
        %v1896 = vmul.f32 0.5, %v1895
        %v1897 = vsub.f32 1.5, %v1896
        %v1898 = vmul.f32 %v1893, %v1897
        %v1899 = vmul.f32 %v1822, %v1898
        %vm1900 = vcmp.eq.f32.partialorder %v1822, inf
        %v1901 = vsel %vm1900, %v1822, %v1899
        %vm1902 = vcmp.eq.f32.partialorder %v1822, 0.0
        %v1903 = vand.u32 %v1822, 2147483648
        %v1904 = vsel %vm1902, %v1903, %v1901
        %v1905 = vrsqrt.pop %v1823
        %v1906 = vmul.f32 %v1905, %v1823
        %v1907 = vmul.f32 %v1906, %v1905
        %v1908 = vmul.f32 0.5, %v1907
        %v1909 = vsub.f32 1.5, %v1908
        %v1910 = vmul.f32 %v1905, %v1909
        %v1911 = vmul.f32 %v1823, %v1910
        %vm1912 = vcmp.eq.f32.partialorder %v1823, inf
        %v1913 = vsel %vm1912, %v1823, %v1911
        %vm1914 = vcmp.eq.f32.partialorder %v1823, 0.0
        %v1915 = vand.u32 %v1823, 2147483648
        %v1916 = vsel %vm1914, %v1915, %v1913
        %v1917 = vrsqrt.pop %v1824
        %v1918 = vmul.f32 %v1917, %v1824
        %v1919 = vmul.f32 %v1918, %v1917
        %v1920 = vmul.f32 0.5, %v1919
        %v1921 = vsub.f32 1.5, %v1920
        %v1922 = vmul.f32 %v1917, %v1921
        %v1923 = vmul.f32 %v1824, %v1922
        %vm1924 = vcmp.eq.f32.partialorder %v1824, inf
        %v1925 = vsel %vm1924, %v1824, %v1923
        %vm1926 = vcmp.eq.f32.partialorder %v1824, 0.0
        %v1927 = vand.u32 %v1824, 2147483648
        %v1928 = vsel %vm1926, %v1927, %v1925
        %v1929 = vrsqrt.pop %v1825
        %v1930 = vmul.f32 %v1929, %v1825
        %v1931 = vmul.f32 %v1930, %v1929
        %v1932 = vmul.f32 0.5, %v1931
        %v1933 = vsub.f32 1.5, %v1932
        %v1934 = vmul.f32 %v1929, %v1933
        %v1935 = vmul.f32 %v1825, %v1934
        %vm1936 = vcmp.eq.f32.partialorder %v1825, inf
        %v1937 = vsel %vm1936, %v1825, %v1935
        %vm1938 = vcmp.eq.f32.partialorder %v1825, 0.0
        %v1939 = vand.u32 %v1825, 2147483648
        %v1940 = vsel %vm1938, %v1939, %v1937
        %v1941 = vrsqrt.pop %v1826
        %v1942 = vmul.f32 %v1941, %v1826
        %v1943 = vmul.f32 %v1942, %v1941
        %v1944 = vmul.f32 0.5, %v1943
        %v1945 = vsub.f32 1.5, %v1944
        %v1946 = vmul.f32 %v1941, %v1945
        %v1947 = vmul.f32 %v1826, %v1946
        %vm1948 = vcmp.eq.f32.partialorder %v1826, inf
        %v1949 = vsel %vm1948, %v1826, %v1947
        %vm1950 = vcmp.eq.f32.partialorder %v1826, 0.0
        %v1951 = vand.u32 %v1826, 2147483648
        %v1952 = vsel %vm1950, %v1951, %v1949
        %v1953 = vrsqrt.pop %v1827
        %v1954 = vmul.f32 %v1953, %v1827
        %v1955 = vmul.f32 %v1954, %v1953
        %v1956 = vmul.f32 0.5, %v1955
        %v1957 = vsub.f32 1.5, %v1956
        %v1958 = vmul.f32 %v1953, %v1957
        %v1959 = vmul.f32 %v1827, %v1958
        %vm1960 = vcmp.eq.f32.partialorder %v1827, inf
        %v1961 = vsel %vm1960, %v1827, %v1959
        %vm1962 = vcmp.eq.f32.partialorder %v1827, 0.0
        %v1963 = vand.u32 %v1827, 2147483648
        %v1964 = vsel %vm1962, %v1963, %v1961
        %v1965 = vrsqrt.pop %v1828
        %v1966 = vmul.f32 %v1965, %v1828
        %v1967 = vmul.f32 %v1966, %v1965
        %v1968 = vmul.f32 0.5, %v1967
        %v1969 = vsub.f32 1.5, %v1968
        %v1970 = vmul.f32 %v1965, %v1969
        %v1971 = vmul.f32 %v1828, %v1970
        %vm1972 = vcmp.eq.f32.partialorder %v1828, inf
        %v1973 = vsel %vm1972, %v1828, %v1971
        %vm1974 = vcmp.eq.f32.partialorder %v1828, 0.0
        %v1975 = vand.u32 %v1828, 2147483648
        %v1976 = vsel %vm1974, %v1975, %v1973
        %v1977 = vrsqrt.pop %v1829
        %v1978 = vmul.f32 %v1977, %v1829
        %v1979 = vmul.f32 %v1978, %v1977
        %v1980 = vmul.f32 0.5, %v1979
        %v1981 = vsub.f32 1.5, %v1980
        %v1982 = vmul.f32 %v1977, %v1981
        %v1983 = vmul.f32 %v1829, %v1982
        %vm1984 = vcmp.eq.f32.partialorder %v1829, inf
        %v1985 = vsel %vm1984, %v1829, %v1983
        %vm1986 = vcmp.eq.f32.partialorder %v1829, 0.0
        %v1987 = vand.u32 %v1829, 2147483648
        %v1988 = vsel %vm1986, %v1987, %v1985
        %v1989 = vrsqrt.pop %v1830
        %v1990 = vmul.f32 %v1989, %v1830
        %v1991 = vmul.f32 %v1990, %v1989
        %v1992 = vmul.f32 0.5, %v1991
        %v1993 = vsub.f32 1.5, %v1992
        %v1994 = vmul.f32 %v1989, %v1993
        %v1995 = vmul.f32 %v1830, %v1994
        %vm1996 = vcmp.eq.f32.partialorder %v1830, inf
        %v1997 = vsel %vm1996, %v1830, %v1995
        %vm1998 = vcmp.eq.f32.partialorder %v1830, 0.0
        %v1999 = vand.u32 %v1830, 2147483648
        %v2000 = vsel %vm1998, %v1999, %v1997
        %v2001 = vrsqrt.pop %v1831
        %v2002 = vmul.f32 %v2001, %v1831
        %v2003 = vmul.f32 %v2002, %v2001
        %v2004 = vmul.f32 0.5, %v2003
        %v2005 = vsub.f32 1.5, %v2004
        %v2006 = vmul.f32 %v2001, %v2005
        %v2007 = vmul.f32 %v1831, %v2006
        %vm2008 = vcmp.eq.f32.partialorder %v1831, inf
        %v2009 = vsel %vm2008, %v1831, %v2007
        %vm2010 = vcmp.eq.f32.partialorder %v1831, 0.0
        %v2011 = vand.u32 %v1831, 2147483648
        %v2012 = vsel %vm2010, %v2011, %v2009
        %v2013 = vrsqrt.pop %v1832
        %v2014 = vmul.f32 %v2013, %v1832
        %v2015 = vmul.f32 %v2014, %v2013
        %v2016 = vmul.f32 0.5, %v2015
        %v2017 = vsub.f32 1.5, %v2016
        %v2018 = vmul.f32 %v2013, %v2017
        %v2019 = vmul.f32 %v1832, %v2018
        %vm2020 = vcmp.eq.f32.partialorder %v1832, inf
        %v2021 = vsel %vm2020, %v1832, %v2019
        %vm2022 = vcmp.eq.f32.partialorder %v1832, 0.0
        %v2023 = vand.u32 %v1832, 2147483648
        %v2024 = vsel %vm2022, %v2023, %v2021
        %v2025 = vsub.f32 %v1317, %v1844
        %v2026 = vsub.f32 %v1329, %v1856
        %v2027 = vsub.f32 %v1341, %v1868
        %v2028 = vsub.f32 %v1353, %v1880
        %v2029 = vsub.f32 %v1365, %v1892
        %v2030 = vsub.f32 %v1377, %v1904
        %v2031 = vsub.f32 %v1389, %v1916
        %v2032 = vsub.f32 %v1401, %v1928
        %v2033 = vsub.f32 %v1413, %v1940
        %v2034 = vsub.f32 %v1425, %v1952
        %v2035 = vsub.f32 %v1437, %v1964
        %v2036 = vsub.f32 %v1449, %v1976
        %v2037 = vsub.f32 %v1461, %v1988
        %v2038 = vsub.f32 %v1473, %v2000
        %v2039 = vsub.f32 %v1485, %v2012
        %v2040 = vsub.f32 %v1497, %v2024
        %v2041 = vmul.f32 %v2025, %v2025
        %v2042 = vmul.f32 %v2026, %v2026
        %v2043 = vmul.f32 %v2027, %v2027
        %v2044 = vmul.f32 %v2028, %v2028
        %v2045 = vmul.f32 %v2029, %v2029
        %v2046 = vmul.f32 %v2030, %v2030
        %v2047 = vmul.f32 %v2031, %v2031
        %v2048 = vmul.f32 %v2032, %v2032
        %v2049 = vmul.f32 %v2033, %v2033
        %v2050 = vmul.f32 %v2034, %v2034
        %v2051 = vmul.f32 %v2035, %v2035
        %v2052 = vmul.f32 %v2036, %v2036
        %v2053 = vmul.f32 %v2037, %v2037
        %v2054 = vmul.f32 %v2038, %v2038
        %v2055 = vmul.f32 %v2039, %v2039
        %v2056 = vmul.f32 %v2040, %v2040
        %v2057 = vmul.f32 %v2041, 0.6944444
        %v2058 = vmul.f32 %v2042, 0.6944444
        %v2059 = vmul.f32 %v2043, 0.6944444
        %v2060 = vmul.f32 %v2044, 0.6944444
        %v2061 = vmul.f32 %v2045, 0.6944444
        %v2062 = vmul.f32 %v2046, 0.6944444
        %v2063 = vmul.f32 %v2047, 0.6944444
        %v2064 = vmul.f32 %v2048, 0.6944444
        %v2065 = vmul.f32 %v2049, 0.6944444
        %v2066 = vmul.f32 %v2050, 0.6944444
        %v2067 = vmul.f32 %v2051, 0.6944444
        %v2068 = vmul.f32 %v2052, 0.6944444
        %v2069 = vmul.f32 %v2053, 0.6944444
        %v2070 = vmul.f32 %v2054, 0.6944444
        %v2071 = vmul.f32 %v2055, 0.6944444
        %v2072 = vmul.f32 %v2056, 0.6944444
        %v2073 = vsub.f32 1.0, %v2057
        %v2074 = vsub.f32 1.0, %v2058
        %v2075 = vsub.f32 1.0, %v2059
        %v2076 = vsub.f32 1.0, %v2060
        %v2077 = vsub.f32 1.0, %v2061
        %v2078 = vsub.f32 1.0, %v2062
        %v2079 = vsub.f32 1.0, %v2063
        %v2080 = vsub.f32 1.0, %v2064
        %v2081 = vsub.f32 1.0, %v2065
        %v2082 = vsub.f32 1.0, %v2066
        %v2083 = vsub.f32 1.0, %v2067
        %v2084 = vsub.f32 1.0, %v2068
        %v2085 = vsub.f32 1.0, %v2069
        %v2086 = vsub.f32 1.0, %v2070
        %v2087 = vsub.f32 1.0, %v2071
        %v2088 = vsub.f32 1.0, %v2072
        %v2089 = vmax.f32 %v2073, 0.0
        %v2090 = vmax.f32 %v2074, 0.0
        %v2091 = vmax.f32 %v2075, 0.0
        %v2092 = vmax.f32 %v2076, 0.0
        %v2093 = vmax.f32 %v2077, 0.0
        %v2094 = vmax.f32 %v2078, 0.0
        %v2095 = vmax.f32 %v2079, 0.0
        %v2096 = vmax.f32 %v2080, 0.0
        %v2097 = vmax.f32 %v2081, 0.0
        %v2098 = vmax.f32 %v2082, 0.0
        %v2099 = vmax.f32 %v2083, 0.0
        %v2100 = vmax.f32 %v2084, 0.0
        %v2101 = vmax.f32 %v2085, 0.0
        %v2102 = vmax.f32 %v2086, 0.0
        %v2103 = vmax.f32 %v2087, 0.0
        %v2104 = vmax.f32 %v2088, 0.0
        %v2121 = vunpack.c.l.b16 %v988
        %v2122 = vunpack.c.l.b16 %v990
        %v2123 = vunpack.c.l.b16 %v992
        %v2124 = vunpack.c.l.b16 %v994
        %v2125 = vunpack.c.l.b16 %v996
        %v2126 = vunpack.c.l.b16 %v998
        %v2127 = vunpack.c.l.b16 %v1000
        %v2128 = vunpack.c.l.b16 %v1002
        %v2129 = vunpack.c.l.b16 %v1004
        %v2130 = vunpack.c.l.b16 %v1006
        %v2131 = vunpack.c.l.b16 %v1008
        %v2132 = vunpack.c.l.b16 %v1010
        %v2133 = vunpack.c.l.b16 %v1012
        %v2134 = vunpack.c.l.b16 %v1014
        %v2135 = vunpack.c.l.b16 %v1016
        %v2136 = vunpack.c.l.b16 %v1018
        %v2137 = vpack.c.b16 %v2122, %v2121
        %v2138 = vpack.c.b16 %v2124, %v2123
        %v2139 = vpack.c.b16 %v2126, %v2125
        %v2140 = vpack.c.b16 %v2128, %v2127
        %v2141 = vpack.c.b16 %v2130, %v2129
        %v2142 = vpack.c.b16 %v2132, %v2131
        %v2143 = vpack.c.b16 %v2134, %v2133
        %v2144 = vpack.c.b16 %v2136, %v2135
        %v2153 = vunpack.c.h.b16 %v988
        %v2154 = vunpack.c.h.b16 %v990
        %v2155 = vunpack.c.h.b16 %v992
        %v2156 = vunpack.c.h.b16 %v994
        %v2157 = vunpack.c.h.b16 %v996
        %v2158 = vunpack.c.h.b16 %v998
        %v2159 = vunpack.c.h.b16 %v1000
        %v2160 = vunpack.c.h.b16 %v1002
        %v2161 = vunpack.c.h.b16 %v1004
        %v2162 = vunpack.c.h.b16 %v1006
        %v2163 = vunpack.c.h.b16 %v1008
        %v2164 = vunpack.c.h.b16 %v1010
        %v2165 = vunpack.c.h.b16 %v1012
        %v2166 = vunpack.c.h.b16 %v1014
        %v2167 = vunpack.c.h.b16 %v1016
        %v2168 = vunpack.c.h.b16 %v1018
        %v2169 = vpack.c.b16 %v2154, %v2153
        %v2170 = vpack.c.b16 %v2156, %v2155
        %v2171 = vpack.c.b16 %v2158, %v2157
        %v2172 = vpack.c.b16 %v2160, %v2159
        %v2173 = vpack.c.b16 %v2162, %v2161
        %v2174 = vpack.c.b16 %v2164, %v2163
        %v2175 = vpack.c.b16 %v2166, %v2165
        %v2176 = vpack.c.b16 %v2168, %v2167
        %2185 = vmatpush.bf16.xpose.msra.mxu0 %v2176
        %2186 = vmatpush.bf16.xpose.msra.mxu0 %v2175
        %2187 = vmatpush.bf16.xpose.msra.mxu0 %v2174
        %2188 = vmatpush.bf16.xpose.msra.mxu0 %v2173
        %2189 = vmatpush.bf16.xpose.msra.mxu0 %v2172
        %2190 = vmatpush.bf16.xpose.msra.mxu0 %v2171
        %2191 = vmatpush.bf16.xpose.msra.mxu0 %v2170
        %2192 = vmatpush.bf16.xpose.msra.mxu0 %v2169
        %2193 = vmatmul.bf16.gmra.mxu0 %v2137
        %v2194 = vpop.f32.mrf.mxu0
        %v2195 = vadd.f32 0.0, %v2194
        %v2196 = vpop.f32.mrf.mxu0
        %v2197 = vadd.f32 0.0, %v2196
        %2198 = vmatmul.bf16.gmra.mxu0 %v2138
        %v2199 = vpop.f32.mrf.mxu0
        %v2200 = vadd.f32 0.0, %v2199
        %v2201 = vpop.f32.mrf.mxu0
        %v2202 = vadd.f32 0.0, %v2201
        %2203 = vmatmul.bf16.gmra.mxu0 %v2139
        %v2204 = vpop.f32.mrf.mxu0
        %v2205 = vadd.f32 0.0, %v2204
        %v2206 = vpop.f32.mrf.mxu0
        %v2207 = vadd.f32 0.0, %v2206
        %2208 = vmatmul.bf16.gmra.mxu0 %v2140
        %v2209 = vpop.f32.mrf.mxu0
        %v2210 = vadd.f32 0.0, %v2209
        %v2211 = vpop.f32.mrf.mxu0
        %v2212 = vadd.f32 0.0, %v2211
        %2213 = vmatmul.bf16.gmra.mxu0 %v2141
        %v2214 = vpop.f32.mrf.mxu0
        %v2215 = vadd.f32 0.0, %v2214
        %v2216 = vpop.f32.mrf.mxu0
        %v2217 = vadd.f32 0.0, %v2216
        %2218 = vmatmul.bf16.gmra.mxu0 %v2142
        %v2219 = vpop.f32.mrf.mxu0
        %v2220 = vadd.f32 0.0, %v2219
        %v2221 = vpop.f32.mrf.mxu0
        %v2222 = vadd.f32 0.0, %v2221
        %2223 = vmatmul.bf16.gmra.mxu0 %v2143
        %v2224 = vpop.f32.mrf.mxu0
        %v2225 = vadd.f32 0.0, %v2224
        %v2226 = vpop.f32.mrf.mxu0
        %v2227 = vadd.f32 0.0, %v2226
        %2228 = vmatmul.bf16.gmra.mxu0 %v2144
        %v2229 = vpop.f32.mrf.mxu0
        %v2230 = vadd.f32 0.0, %v2229
        %v2231 = vpop.f32.mrf.mxu0
        %v2232 = vadd.f32 0.0, %v2231
        %2233 = vdwg.mxu0
        %v2234 = vmul.f32 %v2195, 0.088388346
        %v2235 = vmul.f32 %v2197, 0.088388346
        %v2236 = vmul.f32 %v2200, 0.088388346
        %v2237 = vmul.f32 %v2202, 0.088388346
        %v2238 = vmul.f32 %v2205, 0.088388346
        %v2239 = vmul.f32 %v2207, 0.088388346
        %v2240 = vmul.f32 %v2210, 0.088388346
        %v2241 = vmul.f32 %v2212, 0.088388346
        %v2242 = vmul.f32 %v2215, 0.088388346
        %v2243 = vmul.f32 %v2217, 0.088388346
        %v2244 = vmul.f32 %v2220, 0.088388346
        %v2245 = vmul.f32 %v2222, 0.088388346
        %v2246 = vmul.f32 %v2225, 0.088388346
        %v2247 = vmul.f32 %v2227, 0.088388346
        %v2248 = vmul.f32 %v2230, 0.088388346
        %v2249 = vmul.f32 %v2232, 0.088388346
        %v2250 = vmul.f32 %v2089, %v2234
        %v2251 = vmul.f32 %v2090, %v2235
        %v2252 = vmul.f32 %v2091, %v2236
        %v2253 = vmul.f32 %v2092, %v2237
        %v2254 = vmul.f32 %v2093, %v2238
        %v2255 = vmul.f32 %v2094, %v2239
        %v2256 = vmul.f32 %v2095, %v2240
        %v2257 = vmul.f32 %v2096, %v2241
        %v2258 = vmul.f32 %v2097, %v2242
        %v2259 = vmul.f32 %v2098, %v2243
        %v2260 = vmul.f32 %v2099, %v2244
        %v2261 = vmul.f32 %v2100, %v2245
        %v2262 = vmul.f32 %v2101, %v2246
        %v2263 = vmul.f32 %v2102, %v2247
        %v2264 = vmul.f32 %v2103, %v2248
        %v2265 = vmul.f32 %v2104, %v2249
        %2266 = vmax.xlane.f32.xlu0 %v2250
        %v2267 = vpop.xlane.xlu0 %2266
        %2268 = vmax.xlane.f32.xlu0 %v2251
        %v2269 = vpop.xlane.xlu0 %2268
        %2270 = vmax.xlane.f32.xlu0 %v2252
        %v2271 = vpop.xlane.xlu0 %2270
        %2272 = vmax.xlane.f32.xlu0 %v2253
        %v2273 = vpop.xlane.xlu0 %2272
        %2274 = vmax.xlane.f32.xlu0 %v2254
        %v2275 = vpop.xlane.xlu0 %2274
        %2276 = vmax.xlane.f32.xlu0 %v2255
        %v2277 = vpop.xlane.xlu0 %2276
        %2278 = vmax.xlane.f32.xlu0 %v2256
        %v2279 = vpop.xlane.xlu0 %2278
        %2280 = vmax.xlane.f32.xlu0 %v2257
        %v2281 = vpop.xlane.xlu0 %2280
        %2282 = vmax.xlane.f32.xlu0 %v2258
        %v2283 = vpop.xlane.xlu0 %2282
        %2284 = vmax.xlane.f32.xlu0 %v2259
        %v2285 = vpop.xlane.xlu0 %2284
        %2286 = vmax.xlane.f32.xlu0 %v2260
        %v2287 = vpop.xlane.xlu0 %2286
        %2288 = vmax.xlane.f32.xlu0 %v2261
        %v2289 = vpop.xlane.xlu0 %2288
        %2290 = vmax.xlane.f32.xlu0 %v2262
        %v2291 = vpop.xlane.xlu0 %2290
        %2292 = vmax.xlane.f32.xlu0 %v2263
        %v2293 = vpop.xlane.xlu0 %2292
        %2294 = vmax.xlane.f32.xlu0 %v2264
        %v2295 = vpop.xlane.xlu0 %2294
        %2296 = vmax.xlane.f32.xlu0 %v2265
        %v2297 = vpop.xlane.xlu0 %2296
        %v2298 = vsub.f32 %v2250, %v2267
        %v2299 = vsub.f32 %v2251, %v2269
        %v2300 = vsub.f32 %v2252, %v2271
        %v2301 = vsub.f32 %v2253, %v2273
        %v2302 = vsub.f32 %v2254, %v2275
        %v2303 = vsub.f32 %v2255, %v2277
        %v2304 = vsub.f32 %v2256, %v2279
        %v2305 = vsub.f32 %v2257, %v2281
        %v2306 = vsub.f32 %v2258, %v2283
        %v2307 = vsub.f32 %v2259, %v2285
        %v2308 = vsub.f32 %v2260, %v2287
        %v2309 = vsub.f32 %v2261, %v2289
        %v2310 = vsub.f32 %v2262, %v2291
        %v2311 = vsub.f32 %v2263, %v2293
        %v2312 = vsub.f32 %v2264, %v2295
        %v2313 = vsub.f32 %v2265, %v2297
        %v2314 = vmul.f32 %v2298, 1.442695
        %v2315 = vpow.pop %v2314
        %v2316 = vmul.f32 %v2299, 1.442695
        %v2317 = vpow.pop %v2316
        %v2318 = vmul.f32 %v2300, 1.442695
        %v2319 = vpow.pop %v2318
        %v2320 = vmul.f32 %v2301, 1.442695
        %v2321 = vpow.pop %v2320
        %v2322 = vmul.f32 %v2302, 1.442695
        %v2323 = vpow.pop %v2322
        %v2324 = vmul.f32 %v2303, 1.442695
        %v2325 = vpow.pop %v2324
        %v2326 = vmul.f32 %v2304, 1.442695
        %v2327 = vpow.pop %v2326
        %v2328 = vmul.f32 %v2305, 1.442695
        %v2329 = vpow.pop %v2328
        %v2330 = vmul.f32 %v2306, 1.442695
        %v2331 = vpow.pop %v2330
        %v2332 = vmul.f32 %v2307, 1.442695
        %v2333 = vpow.pop %v2332
        %v2334 = vmul.f32 %v2308, 1.442695
        %v2335 = vpow.pop %v2334
        %v2336 = vmul.f32 %v2309, 1.442695
        %v2337 = vpow.pop %v2336
        %v2338 = vmul.f32 %v2310, 1.442695
        %v2339 = vpow.pop %v2338
        %v2340 = vmul.f32 %v2311, 1.442695
        %v2341 = vpow.pop %v2340
        %v2342 = vmul.f32 %v2312, 1.442695
        %v2343 = vpow.pop %v2342
        %v2344 = vmul.f32 %v2313, 1.442695
        %v2345 = vpow.pop %v2344
        %2346 = vadd.xlane.f32.xlu0 %v2315
        %v2347 = vpop.xlane.xlu0 %2346
        %2348 = vadd.xlane.f32.xlu0 %v2317
        %v2349 = vpop.xlane.xlu0 %2348
        %2350 = vadd.xlane.f32.xlu0 %v2319
        %v2351 = vpop.xlane.xlu0 %2350
        %2352 = vadd.xlane.f32.xlu0 %v2321
        %v2353 = vpop.xlane.xlu0 %2352
        %2354 = vadd.xlane.f32.xlu0 %v2323
        %v2355 = vpop.xlane.xlu0 %2354
        %2356 = vadd.xlane.f32.xlu0 %v2325
        %v2357 = vpop.xlane.xlu0 %2356
        %2358 = vadd.xlane.f32.xlu0 %v2327
        %v2359 = vpop.xlane.xlu0 %2358
        %2360 = vadd.xlane.f32.xlu0 %v2329
        %v2361 = vpop.xlane.xlu0 %2360
        %2362 = vadd.xlane.f32.xlu0 %v2331
        %v2363 = vpop.xlane.xlu0 %2362
        %2364 = vadd.xlane.f32.xlu0 %v2333
        %v2365 = vpop.xlane.xlu0 %2364
        %2366 = vadd.xlane.f32.xlu0 %v2335
        %v2367 = vpop.xlane.xlu0 %2366
        %2368 = vadd.xlane.f32.xlu0 %v2337
        %v2369 = vpop.xlane.xlu0 %2368
        %2370 = vadd.xlane.f32.xlu0 %v2339
        %v2371 = vpop.xlane.xlu0 %2370
        %2372 = vadd.xlane.f32.xlu0 %v2341
        %v2373 = vpop.xlane.xlu0 %2372
        %2374 = vadd.xlane.f32.xlu0 %v2343
        %v2375 = vpop.xlane.xlu0 %2374
        %2376 = vadd.xlane.f32.xlu0 %v2345
        %v2377 = vpop.xlane.xlu0 %2376
        %v2378 = vrcp.pop %v2347
        %v2379 = vrcp.pop %v2349
        %v2380 = vrcp.pop %v2351
        %v2381 = vrcp.pop %v2353
        %v2382 = vrcp.pop %v2355
        %v2383 = vrcp.pop %v2357
        %v2384 = vrcp.pop %v2359
        %v2385 = vrcp.pop %v2361
        %v2386 = vrcp.pop %v2363
        %v2387 = vrcp.pop %v2365
        %v2388 = vrcp.pop %v2367
        %v2389 = vrcp.pop %v2369
        %v2390 = vrcp.pop %v2371
        %v2391 = vrcp.pop %v2373
        %v2392 = vrcp.pop %v2375
        %v2393 = vrcp.pop %v2377
        %v2394 = vmul.f32 %v2315, %v2378
        %v2395 = vmul.f32 %v2317, %v2379
        %v2396 = vmul.f32 %v2319, %v2380
        %v2397 = vmul.f32 %v2321, %v2381
        %v2398 = vmul.f32 %v2323, %v2382
        %v2399 = vmul.f32 %v2325, %v2383
        %v2400 = vmul.f32 %v2327, %v2384
        %v2401 = vmul.f32 %v2329, %v2385
        %v2402 = vmul.f32 %v2331, %v2386
        %v2403 = vmul.f32 %v2333, %v2387
        %v2404 = vmul.f32 %v2335, %v2388
        %v2405 = vmul.f32 %v2337, %v2389
        %v2406 = vmul.f32 %v2339, %v2390
        %v2407 = vmul.f32 %v2341, %v2391
        %v2408 = vmul.f32 %v2343, %v2392
        %v2409 = vmul.f32 %v2345, %v2393
        %v2410 = vpack.c.bf16 %v2395, %v2394
        %v2411 = vpack.c.bf16 %v2397, %v2396
        %v2412 = vpack.c.bf16 %v2399, %v2398
        %v2413 = vpack.c.bf16 %v2401, %v2400
        %v2414 = vpack.c.bf16 %v2403, %v2402
        %v2415 = vpack.c.bf16 %v2405, %v2404
        %v2416 = vpack.c.bf16 %v2407, %v2406
        %v2417 = vpack.c.bf16 %v2409, %v2408
        %v2434 = vunpack.c.l.b16 %v989
        %v2435 = vunpack.c.l.b16 %v991
        %v2436 = vunpack.c.l.b16 %v993
        %v2437 = vunpack.c.l.b16 %v995
        %v2438 = vunpack.c.l.b16 %v997
        %v2439 = vunpack.c.l.b16 %v999
        %v2440 = vunpack.c.l.b16 %v1001
        %v2441 = vunpack.c.l.b16 %v1003
        %v2442 = vunpack.c.l.b16 %v1005
        %v2443 = vunpack.c.l.b16 %v1007
        %v2444 = vunpack.c.l.b16 %v1009
        %v2445 = vunpack.c.l.b16 %v1011
        %v2446 = vunpack.c.l.b16 %v1013
        %v2447 = vunpack.c.l.b16 %v1015
        %v2448 = vunpack.c.l.b16 %v1017
        %v2449 = vunpack.c.l.b16 %v1019
        %v2450 = vpack.c.b16 %v2435, %v2434
        %v2451 = vpack.c.b16 %v2437, %v2436
        %v2452 = vpack.c.b16 %v2439, %v2438
        %v2453 = vpack.c.b16 %v2441, %v2440
        %v2454 = vpack.c.b16 %v2443, %v2442
        %v2455 = vpack.c.b16 %v2445, %v2444
        %v2456 = vpack.c.b16 %v2447, %v2446
        %v2457 = vpack.c.b16 %v2449, %v2448
        %2466 = vmatpush.bf16.msra.mxu0 %v2457
        %2467 = vmatpush.bf16.msra.mxu0 %v2456
        %2468 = vmatpush.bf16.msra.mxu0 %v2455
        %2469 = vmatpush.bf16.msra.mxu0 %v2454
        %2470 = vmatpush.bf16.msra.mxu0 %v2453
        %2471 = vmatpush.bf16.msra.mxu0 %v2452
        %2472 = vmatpush.bf16.msra.mxu0 %v2451
        %2473 = vmatpush.bf16.msra.mxu0 %v2450
        %2474 = vmatmul.bf16.gmra.mxu0 %v2410
        %v2475 = vpop.f32.mrf.mxu0
        %v2476 = vadd.f32 0.0, %v2475
        %v2477 = vpop.f32.mrf.mxu0
        %v2478 = vadd.f32 0.0, %v2477
        %2479 = vmatmul.bf16.gmra.mxu0 %v2411
        %v2480 = vpop.f32.mrf.mxu0
        %v2481 = vadd.f32 0.0, %v2480
        %v2482 = vpop.f32.mrf.mxu0
        %v2483 = vadd.f32 0.0, %v2482
        %2484 = vmatmul.bf16.gmra.mxu0 %v2412
        %v2485 = vpop.f32.mrf.mxu0
        %v2486 = vadd.f32 0.0, %v2485
        %v2487 = vpop.f32.mrf.mxu0
        %v2488 = vadd.f32 0.0, %v2487
        %2489 = vmatmul.bf16.gmra.mxu0 %v2413
        %v2490 = vpop.f32.mrf.mxu0
        %v2491 = vadd.f32 0.0, %v2490
        %v2492 = vpop.f32.mrf.mxu0
        %v2493 = vadd.f32 0.0, %v2492
        %2494 = vmatmul.bf16.gmra.mxu0 %v2414
        %v2495 = vpop.f32.mrf.mxu0
        %v2496 = vadd.f32 0.0, %v2495
        %v2497 = vpop.f32.mrf.mxu0
        %v2498 = vadd.f32 0.0, %v2497
        %2499 = vmatmul.bf16.gmra.mxu0 %v2415
        %v2500 = vpop.f32.mrf.mxu0
        %v2501 = vadd.f32 0.0, %v2500
        %v2502 = vpop.f32.mrf.mxu0
        %v2503 = vadd.f32 0.0, %v2502
        %2504 = vmatmul.bf16.gmra.mxu0 %v2416
        %v2505 = vpop.f32.mrf.mxu0
        %v2506 = vadd.f32 0.0, %v2505
        %v2507 = vpop.f32.mrf.mxu0
        %v2508 = vadd.f32 0.0, %v2507
        %2509 = vmatmul.bf16.gmra.mxu0 %v2417
        %v2510 = vpop.f32.mrf.mxu0
        %v2511 = vadd.f32 0.0, %v2510
        %v2512 = vpop.f32.mrf.mxu0
        %v2513 = vadd.f32 0.0, %v2512
        %2514 = vdwg.mxu0
        %v2515 = vpack.c.bf16 %v2478, %v2476
        %v2516 = vpack.c.bf16 %v2483, %v2481
        %v2517 = vpack.c.bf16 %v2488, %v2486
        %v2518 = vpack.c.bf16 %v2493, %v2491
        %v2519 = vpack.c.bf16 %v2498, %v2496
        %v2520 = vpack.c.bf16 %v2503, %v2501
        %v2521 = vpack.c.bf16 %v2508, %v2506
        %v2522 = vpack.c.bf16 %v2513, %v2511
        %v2523 = vld [vmem:[%s4] sm:$0xf]
        %v2524 = vld [vmem:[%s4 + $0x4] sm:$0xf]
        %v2525 = vld [vmem:[%s4 + $0x8] sm:$0xf]
        %v2526 = vld [vmem:[%s4 + $0xc] sm:$0xf]
        %v2527 = vld [vmem:[%s4 + $0x10] sm:$0xf]
        %v2528 = vld [vmem:[%s4 + $0x14] sm:$0xf]
        %v2529 = vld [vmem:[%s4 + $0x18] sm:$0xf]
        %v2530 = vld [vmem:[%s4 + $0x1c] sm:$0xf]
        %v2531 = vld [vmem:[%s4 + $0x20] sm:$0xf]
        %v2532 = vld [vmem:[%s4 + $0x24] sm:$0xf]
        %v2533 = vld [vmem:[%s4 + $0x28] sm:$0xf]
        %v2534 = vld [vmem:[%s4 + $0x2c] sm:$0xf]
        %v2535 = vld [vmem:[%s4 + $0x30] sm:$0xf]
        %v2536 = vld [vmem:[%s4 + $0x34] sm:$0xf]
        %v2537 = vld [vmem:[%s4 + $0x38] sm:$0xf]
        %v2538 = vld [vmem:[%s4 + $0x3c] sm:$0xf]
        %v2555 = vunpack.c.l.b16 %v2523
        %v2556 = vunpack.c.l.b16 %v2524
        %v2557 = vunpack.c.l.b16 %v2525
        %v2558 = vunpack.c.l.b16 %v2526
        %v2559 = vunpack.c.l.b16 %v2527
        %v2560 = vunpack.c.l.b16 %v2528
        %v2561 = vunpack.c.l.b16 %v2529
        %v2562 = vunpack.c.l.b16 %v2530
        %v2563 = vunpack.c.l.b16 %v2531
        %v2564 = vunpack.c.l.b16 %v2532
        %v2565 = vunpack.c.l.b16 %v2533
        %v2566 = vunpack.c.l.b16 %v2534
        %v2567 = vunpack.c.l.b16 %v2535
        %v2568 = vunpack.c.l.b16 %v2536
        %v2569 = vunpack.c.l.b16 %v2537
        %v2570 = vunpack.c.l.b16 %v2538
        %v2571 = vpack.c.b16 %v2556, %v2555
        %v2572 = vpack.c.b16 %v2558, %v2557
        %v2573 = vpack.c.b16 %v2560, %v2559
        %v2574 = vpack.c.b16 %v2562, %v2561
        %v2575 = vpack.c.b16 %v2564, %v2563
        %v2576 = vpack.c.b16 %v2566, %v2565
        %v2577 = vpack.c.b16 %v2568, %v2567
        %v2578 = vpack.c.b16 %v2570, %v2569
        %2587 = vmatpush.bf16.msra.mxu0 %v2578
        %2588 = vmatpush.bf16.msra.mxu0 %v2577
        %2589 = vmatpush.bf16.msra.mxu0 %v2576
        %2590 = vmatpush.bf16.msra.mxu0 %v2575
        %2591 = vmatpush.bf16.msra.mxu0 %v2574
        %2592 = vmatpush.bf16.msra.mxu0 %v2573
        %2593 = vmatpush.bf16.msra.mxu0 %v2572
        %2594 = vmatpush.bf16.msra.mxu0 %v2571
        %2595 = vmatmul.bf16.gmra.mxu0 %v2515
        %v2596 = vpop.f32.mrf.mxu0
        %v2597 = vadd.f32 0.0, %v2596
        %v2598 = vpop.f32.mrf.mxu0
        %v2599 = vadd.f32 0.0, %v2598
        %2600 = vmatmul.bf16.gmra.mxu0 %v2516
        %v2601 = vpop.f32.mrf.mxu0
        %v2602 = vadd.f32 0.0, %v2601
        %v2603 = vpop.f32.mrf.mxu0
        %v2604 = vadd.f32 0.0, %v2603
        %2605 = vmatmul.bf16.gmra.mxu0 %v2517
        %v2606 = vpop.f32.mrf.mxu0
        %v2607 = vadd.f32 0.0, %v2606
        %v2608 = vpop.f32.mrf.mxu0
        %v2609 = vadd.f32 0.0, %v2608
        %2610 = vmatmul.bf16.gmra.mxu0 %v2518
        %v2611 = vpop.f32.mrf.mxu0
        %v2612 = vadd.f32 0.0, %v2611
        %v2613 = vpop.f32.mrf.mxu0
        %v2614 = vadd.f32 0.0, %v2613
        %2615 = vmatmul.bf16.gmra.mxu0 %v2519
        %v2616 = vpop.f32.mrf.mxu0
        %v2617 = vadd.f32 0.0, %v2616
        %v2618 = vpop.f32.mrf.mxu0
        %v2619 = vadd.f32 0.0, %v2618
        %2620 = vmatmul.bf16.gmra.mxu0 %v2520
        %v2621 = vpop.f32.mrf.mxu0
        %v2622 = vadd.f32 0.0, %v2621
        %v2623 = vpop.f32.mrf.mxu0
        %v2624 = vadd.f32 0.0, %v2623
        %2625 = vmatmul.bf16.gmra.mxu0 %v2521
        %v2626 = vpop.f32.mrf.mxu0
        %v2627 = vadd.f32 0.0, %v2626
        %v2628 = vpop.f32.mrf.mxu0
        %v2629 = vadd.f32 0.0, %v2628
        %2630 = vmatmul.bf16.gmra.mxu0 %v2522
        %v2631 = vpop.f32.mrf.mxu0
        %v2632 = vadd.f32 0.0, %v2631
        %v2633 = vpop.f32.mrf.mxu0
        %v2634 = vadd.f32 0.0, %v2633
        %2635 = vdwg.mxu0
        %v2636 = vperm.slane %v331, 0
        %v2637 = vmul.f32 %v2597, %v2636
        %v2638 = vmul.f32 %v2599, %v2636
        %v2639 = vmul.f32 %v2602, %v2636
        %v2640 = vmul.f32 %v2604, %v2636
        %v2641 = vmul.f32 %v2607, %v2636
        %v2642 = vmul.f32 %v2609, %v2636
        %v2643 = vmul.f32 %v2612, %v2636
        %v2644 = vmul.f32 %v2614, %v2636
        %v2645 = vmul.f32 %v2617, %v2636
        %v2646 = vmul.f32 %v2619, %v2636
        %v2647 = vmul.f32 %v2622, %v2636
        %v2648 = vmul.f32 %v2624, %v2636
        %v2649 = vmul.f32 %v2627, %v2636
        %v2650 = vmul.f32 %v2629, %v2636
        %v2651 = vmul.f32 %v2632, %v2636
        %v2652 = vmul.f32 %v2634, %v2636
        %v2653 = vperm.slane %v332, 0
        %v2654 = vadd.f32 %v2637, %v2653
        %v2655 = vadd.f32 %v2638, %v2653
        %v2656 = vadd.f32 %v2639, %v2653
        %v2657 = vadd.f32 %v2640, %v2653
        %v2658 = vadd.f32 %v2641, %v2653
        %v2659 = vadd.f32 %v2642, %v2653
        %v2660 = vadd.f32 %v2643, %v2653
        %v2661 = vadd.f32 %v2644, %v2653
        %v2662 = vadd.f32 %v2645, %v2653
        %v2663 = vadd.f32 %v2646, %v2653
        %v2664 = vadd.f32 %v2647, %v2653
        %v2665 = vadd.f32 %v2648, %v2653
        %v2666 = vadd.f32 %v2649, %v2653
        %v2667 = vadd.f32 %v2650, %v2653
        %v2668 = vadd.f32 %v2651, %v2653
        %v2669 = vadd.f32 %v2652, %v2653
        %v2670 = vmax.f32 %v2654, 0.0
        %v2671 = vmax.f32 %v2655, 0.0
        %v2672 = vmax.f32 %v2656, 0.0
        %v2673 = vmax.f32 %v2657, 0.0
        %v2674 = vmax.f32 %v2658, 0.0
        %v2675 = vmax.f32 %v2659, 0.0
        %v2676 = vmax.f32 %v2660, 0.0
        %v2677 = vmax.f32 %v2661, 0.0
        %v2678 = vmax.f32 %v2662, 0.0
        %v2679 = vmax.f32 %v2663, 0.0
        %v2680 = vmax.f32 %v2664, 0.0
        %v2681 = vmax.f32 %v2665, 0.0
        %v2682 = vmax.f32 %v2666, 0.0
        %v2683 = vmax.f32 %v2667, 0.0
        %v2684 = vmax.f32 %v2668, 0.0
        %v2685 = vmax.f32 %v2669, 0.0
        %v2686 = vpack.c.bf16 %v2671, %v2670
        %v2687 = vpack.c.bf16 %v2673, %v2672
        %v2688 = vpack.c.bf16 %v2675, %v2674
        %v2689 = vpack.c.bf16 %v2677, %v2676
        %v2690 = vpack.c.bf16 %v2679, %v2678
        %v2691 = vpack.c.bf16 %v2681, %v2680
        %v2692 = vpack.c.bf16 %v2683, %v2682
        %v2693 = vpack.c.bf16 %v2685, %v2684
        %v2694 = vld [vmem:[%s5] sm:$0xf]
        %v2695 = vld [vmem:[%s5 + $0x4] sm:$0xf]
        %v2696 = vld [vmem:[%s5 + $0x8] sm:$0xf]
        %v2697 = vld [vmem:[%s5 + $0xc] sm:$0xf]
        %v2698 = vld [vmem:[%s5 + $0x10] sm:$0xf]
        %v2699 = vld [vmem:[%s5 + $0x14] sm:$0xf]
        %v2700 = vld [vmem:[%s5 + $0x18] sm:$0xf]
        %v2701 = vld [vmem:[%s5 + $0x1c] sm:$0xf]
        %v2702 = vld [vmem:[%s5 + $0x20] sm:$0xf]
        %v2703 = vld [vmem:[%s5 + $0x24] sm:$0xf]
        %v2704 = vld [vmem:[%s5 + $0x28] sm:$0xf]
        %v2705 = vld [vmem:[%s5 + $0x2c] sm:$0xf]
        %v2706 = vld [vmem:[%s5 + $0x30] sm:$0xf]
        %v2707 = vld [vmem:[%s5 + $0x34] sm:$0xf]
        %v2708 = vld [vmem:[%s5 + $0x38] sm:$0xf]
        %v2709 = vld [vmem:[%s5 + $0x3c] sm:$0xf]
        %v2726 = vunpack.c.l.b16 %v2694
        %v2727 = vunpack.c.l.b16 %v2695
        %v2728 = vunpack.c.l.b16 %v2696
        %v2729 = vunpack.c.l.b16 %v2697
        %v2730 = vunpack.c.l.b16 %v2698
        %v2731 = vunpack.c.l.b16 %v2699
        %v2732 = vunpack.c.l.b16 %v2700
        %v2733 = vunpack.c.l.b16 %v2701
        %v2734 = vunpack.c.l.b16 %v2702
        %v2735 = vunpack.c.l.b16 %v2703
        %v2736 = vunpack.c.l.b16 %v2704
        %v2737 = vunpack.c.l.b16 %v2705
        %v2738 = vunpack.c.l.b16 %v2706
        %v2739 = vunpack.c.l.b16 %v2707
        %v2740 = vunpack.c.l.b16 %v2708
        %v2741 = vunpack.c.l.b16 %v2709
        %v2742 = vpack.c.b16 %v2727, %v2726
        %v2743 = vpack.c.b16 %v2729, %v2728
        %v2744 = vpack.c.b16 %v2731, %v2730
        %v2745 = vpack.c.b16 %v2733, %v2732
        %v2746 = vpack.c.b16 %v2735, %v2734
        %v2747 = vpack.c.b16 %v2737, %v2736
        %v2748 = vpack.c.b16 %v2739, %v2738
        %v2749 = vpack.c.b16 %v2741, %v2740
        %2758 = vmatpush.bf16.msra.mxu0 %v2749
        %2759 = vmatpush.bf16.msra.mxu0 %v2748
        %2760 = vmatpush.bf16.msra.mxu0 %v2747
        %2761 = vmatpush.bf16.msra.mxu0 %v2746
        %2762 = vmatpush.bf16.msra.mxu0 %v2745
        %2763 = vmatpush.bf16.msra.mxu0 %v2744
        %2764 = vmatpush.bf16.msra.mxu0 %v2743
        %2765 = vmatpush.bf16.msra.mxu0 %v2742
        %2766 = vmatmul.bf16.gmra.mxu0 %v2686
        %v2767 = vpop.f32.mrf.mxu0
        %v2768 = vadd.f32 0.0, %v2767
        %v2769 = vpop.f32.mrf.mxu0
        %v2770 = vadd.f32 0.0, %v2769
        %2771 = vmatmul.bf16.gmra.mxu0 %v2687
        %v2772 = vpop.f32.mrf.mxu0
        %v2773 = vadd.f32 0.0, %v2772
        %v2774 = vpop.f32.mrf.mxu0
        %v2775 = vadd.f32 0.0, %v2774
        %2776 = vmatmul.bf16.gmra.mxu0 %v2688
        %v2777 = vpop.f32.mrf.mxu0
        %v2778 = vadd.f32 0.0, %v2777
        %v2779 = vpop.f32.mrf.mxu0
        %v2780 = vadd.f32 0.0, %v2779
        %2781 = vmatmul.bf16.gmra.mxu0 %v2689
        %v2782 = vpop.f32.mrf.mxu0
        %v2783 = vadd.f32 0.0, %v2782
        %v2784 = vpop.f32.mrf.mxu0
        %v2785 = vadd.f32 0.0, %v2784
        %2786 = vmatmul.bf16.gmra.mxu0 %v2690
        %v2787 = vpop.f32.mrf.mxu0
        %v2788 = vadd.f32 0.0, %v2787
        %v2789 = vpop.f32.mrf.mxu0
        %v2790 = vadd.f32 0.0, %v2789
        %2791 = vmatmul.bf16.gmra.mxu0 %v2691
        %v2792 = vpop.f32.mrf.mxu0
        %v2793 = vadd.f32 0.0, %v2792
        %v2794 = vpop.f32.mrf.mxu0
        %v2795 = vadd.f32 0.0, %v2794
        %2796 = vmatmul.bf16.gmra.mxu0 %v2692
        %v2797 = vpop.f32.mrf.mxu0
        %v2798 = vadd.f32 0.0, %v2797
        %v2799 = vpop.f32.mrf.mxu0
        %v2800 = vadd.f32 0.0, %v2799
        %2801 = vmatmul.bf16.gmra.mxu0 %v2693
        %v2802 = vpop.f32.mrf.mxu0
        %v2803 = vadd.f32 0.0, %v2802
        %v2804 = vpop.f32.mrf.mxu0
        %v2805 = vadd.f32 0.0, %v2804
        %2806 = vdwg.mxu0
        %v2807 = vperm.slane %v333, 0
        %v2808 = vmul.f32 %v2768, %v2807
        %v2809 = vmul.f32 %v2770, %v2807
        %v2810 = vmul.f32 %v2773, %v2807
        %v2811 = vmul.f32 %v2775, %v2807
        %v2812 = vmul.f32 %v2778, %v2807
        %v2813 = vmul.f32 %v2780, %v2807
        %v2814 = vmul.f32 %v2783, %v2807
        %v2815 = vmul.f32 %v2785, %v2807
        %v2816 = vmul.f32 %v2788, %v2807
        %v2817 = vmul.f32 %v2790, %v2807
        %v2818 = vmul.f32 %v2793, %v2807
        %v2819 = vmul.f32 %v2795, %v2807
        %v2820 = vmul.f32 %v2798, %v2807
        %v2821 = vmul.f32 %v2800, %v2807
        %v2822 = vmul.f32 %v2803, %v2807
        %v2823 = vmul.f32 %v2805, %v2807
        %v2824 = vperm.slane %v334, 0
        %v2825 = vadd.f32 %v2808, %v2824
        %v2826 = vadd.f32 %v2809, %v2824
        %v2827 = vadd.f32 %v2810, %v2824
        %v2828 = vadd.f32 %v2811, %v2824
        %v2829 = vadd.f32 %v2812, %v2824
        %v2830 = vadd.f32 %v2813, %v2824
        %v2831 = vadd.f32 %v2814, %v2824
        %v2832 = vadd.f32 %v2815, %v2824
        %v2833 = vadd.f32 %v2816, %v2824
        %v2834 = vadd.f32 %v2817, %v2824
        %v2835 = vadd.f32 %v2818, %v2824
        %v2836 = vadd.f32 %v2819, %v2824
        %v2837 = vadd.f32 %v2820, %v2824
        %v2838 = vadd.f32 %v2821, %v2824
        %v2839 = vadd.f32 %v2822, %v2824
        %v2840 = vadd.f32 %v2823, %v2824
        %v2841 = vmax.f32 %v2825, 0.0
        %v2842 = vmax.f32 %v2826, 0.0
        %v2843 = vmax.f32 %v2827, 0.0
        %v2844 = vmax.f32 %v2828, 0.0
        %v2845 = vmax.f32 %v2829, 0.0
        %v2846 = vmax.f32 %v2830, 0.0
        %v2847 = vmax.f32 %v2831, 0.0
        %v2848 = vmax.f32 %v2832, 0.0
        %v2849 = vmax.f32 %v2833, 0.0
        %v2850 = vmax.f32 %v2834, 0.0
        %v2851 = vmax.f32 %v2835, 0.0
        %v2852 = vmax.f32 %v2836, 0.0
        %v2853 = vmax.f32 %v2837, 0.0
        %v2854 = vmax.f32 %v2838, 0.0
        %v2855 = vmax.f32 %v2839, 0.0
        %v2856 = vmax.f32 %v2840, 0.0
        %v2857 = vpack.c.bf16 %v2842, %v2841
        %v2858 = vpack.c.bf16 %v2844, %v2843
        %v2859 = vpack.c.bf16 %v2846, %v2845
        %v2860 = vpack.c.bf16 %v2848, %v2847
        %v2861 = vpack.c.bf16 %v2850, %v2849
        %v2862 = vpack.c.bf16 %v2852, %v2851
        %v2863 = vpack.c.bf16 %v2854, %v2853
        %v2864 = vpack.c.bf16 %v2856, %v2855
        %v2865 = vld [vmem:[%s6] sm:$0xf]
        %v2866 = vld [vmem:[%s6 + $0x4] sm:$0xf]
        %v2867 = vld [vmem:[%s6 + $0x8] sm:$0xf]
        %v2868 = vld [vmem:[%s6 + $0xc] sm:$0xf]
        %v2869 = vld [vmem:[%s6 + $0x10] sm:$0xf]
        %v2870 = vld [vmem:[%s6 + $0x14] sm:$0xf]
        %v2871 = vld [vmem:[%s6 + $0x18] sm:$0xf]
        %v2872 = vld [vmem:[%s6 + $0x1c] sm:$0xf]
        %v2873 = vld [vmem:[%s6 + $0x20] sm:$0xf]
        %v2874 = vld [vmem:[%s6 + $0x24] sm:$0xf]
        %v2875 = vld [vmem:[%s6 + $0x28] sm:$0xf]
        %v2876 = vld [vmem:[%s6 + $0x2c] sm:$0xf]
        %v2877 = vld [vmem:[%s6 + $0x30] sm:$0xf]
        %v2878 = vld [vmem:[%s6 + $0x34] sm:$0xf]
        %v2879 = vld [vmem:[%s6 + $0x38] sm:$0xf]
        %v2880 = vld [vmem:[%s6 + $0x3c] sm:$0xf]
        %v2881 = vperm.slane %v335, 0
        %v2898 = vunpack.c.l.b16 %v2865
        %v2899 = vunpack.c.l.b16 %v2866
        %v2900 = vunpack.c.l.b16 %v2867
        %v2901 = vunpack.c.l.b16 %v2868
        %v2902 = vunpack.c.l.b16 %v2869
        %v2903 = vunpack.c.l.b16 %v2870
        %v2904 = vunpack.c.l.b16 %v2871
        %v2905 = vunpack.c.l.b16 %v2872
        %v2906 = vunpack.c.l.b16 %v2873
        %v2907 = vunpack.c.l.b16 %v2874
        %v2908 = vunpack.c.l.b16 %v2875
        %v2909 = vunpack.c.l.b16 %v2876
        %v2910 = vunpack.c.l.b16 %v2877
        %v2911 = vunpack.c.l.b16 %v2878
        %v2912 = vunpack.c.l.b16 %v2879
        %v2913 = vunpack.c.l.b16 %v2880
        %v2914 = vpack.c.b16 %v2899, %v2898
        %v2915 = vpack.c.b16 %v2901, %v2900
        %v2916 = vpack.c.b16 %v2903, %v2902
        %v2917 = vpack.c.b16 %v2905, %v2904
        %v2918 = vpack.c.b16 %v2907, %v2906
        %v2919 = vpack.c.b16 %v2909, %v2908
        %v2920 = vpack.c.b16 %v2911, %v2910
        %v2921 = vpack.c.b16 %v2913, %v2912
        %2930 = vmatpush.bf16.msra.mxu0 %v2921
        %2931 = vmatpush.bf16.msra.mxu0 %v2920
        %2932 = vmatpush.bf16.msra.mxu0 %v2919
        %2933 = vmatpush.bf16.msra.mxu0 %v2918
        %2934 = vmatpush.bf16.msra.mxu0 %v2917
        %2935 = vmatpush.bf16.msra.mxu0 %v2916
        %2936 = vmatpush.bf16.msra.mxu0 %v2915
        %2937 = vmatpush.bf16.msra.mxu0 %v2914
        %2938 = vmatmul.bf16.gmra.mxu0 %v2857
        %v2939 = vpop.f32.mrf.mxu0
        %v2940 = vadd.f32 %v2881, %v2939
        %v2941 = vpop.f32.mrf.mxu0
        %v2942 = vadd.f32 %v2881, %v2941
        %2943 = vmatmul.bf16.gmra.mxu0 %v2858
        %v2944 = vpop.f32.mrf.mxu0
        %v2945 = vadd.f32 %v2881, %v2944
        %v2946 = vpop.f32.mrf.mxu0
        %v2947 = vadd.f32 %v2881, %v2946
        %2948 = vmatmul.bf16.gmra.mxu0 %v2859
        %v2949 = vpop.f32.mrf.mxu0
        %v2950 = vadd.f32 %v2881, %v2949
        %v2951 = vpop.f32.mrf.mxu0
        %v2952 = vadd.f32 %v2881, %v2951
        %2953 = vmatmul.bf16.gmra.mxu0 %v2860
        %v2954 = vpop.f32.mrf.mxu0
        %v2955 = vadd.f32 %v2881, %v2954
        %v2956 = vpop.f32.mrf.mxu0
        %v2957 = vadd.f32 %v2881, %v2956
        %2958 = vmatmul.bf16.gmra.mxu0 %v2861
        %v2959 = vpop.f32.mrf.mxu0
        %v2960 = vadd.f32 %v2881, %v2959
        %v2961 = vpop.f32.mrf.mxu0
        %v2962 = vadd.f32 %v2881, %v2961
        %2963 = vmatmul.bf16.gmra.mxu0 %v2862
        %v2964 = vpop.f32.mrf.mxu0
        %v2965 = vadd.f32 %v2881, %v2964
        %v2966 = vpop.f32.mrf.mxu0
        %v2967 = vadd.f32 %v2881, %v2966
        %2968 = vmatmul.bf16.gmra.mxu0 %v2863
        %v2969 = vpop.f32.mrf.mxu0
        %v2970 = vadd.f32 %v2881, %v2969
        %v2971 = vpop.f32.mrf.mxu0
        %v2972 = vadd.f32 %v2881, %v2971
        %2973 = vmatmul.bf16.gmra.mxu0 %v2864
        %v2974 = vpop.f32.mrf.mxu0
        %v2975 = vadd.f32 %v2881, %v2974
        %v2976 = vpop.f32.mrf.mxu0
        %v2977 = vadd.f32 %v2881, %v2976
        %2978 = vdwg.mxu0
        %v2979 = vadd.f32 %v649, %v2940
        %v2980 = vadd.f32 %v650, %v2942
        %v2981 = vadd.f32 %v651, %v2945
        %v2982 = vadd.f32 %v652, %v2947
        %v2983 = vadd.f32 %v653, %v2950
        %v2984 = vadd.f32 %v654, %v2952
        %v2985 = vadd.f32 %v655, %v2955
        %v2986 = vadd.f32 %v656, %v2957
        %v2987 = vadd.f32 %v657, %v2960
        %v2988 = vadd.f32 %v658, %v2962
        %v2989 = vadd.f32 %v659, %v2965
        %v2990 = vadd.f32 %v660, %v2967
        %v2991 = vadd.f32 %v661, %v2970
        %v2992 = vadd.f32 %v662, %v2972
        %v2993 = vadd.f32 %v663, %v2975
        %v2994 = vadd.f32 %v664, %v2977
        %2995 = vxpose.xlu0.b32.start [1/16] %v2979, 128
        %2996 = vxpose.xlu0.b32.cont [2/16] %v2980, 128
        %2997 = vxpose.xlu0.b32.cont [3/16] %v2981, 128
        %2998 = vxpose.xlu0.b32.cont [4/16] %v2982, 128
        %2999 = vxpose.xlu0.b32.cont [5/16] %v2983, 128
        %3000 = vxpose.xlu0.b32.cont [6/16] %v2984, 128
        %3001 = vxpose.xlu0.b32.cont [7/16] %v2985, 128
        %3002 = vxpose.xlu0.b32.cont [8/16] %v2986, 128
        %3003 = vxpose.xlu0.b32.cont [9/16] %v2987, 128
        %3004 = vxpose.xlu0.b32.cont [10/16] %v2988, 128
        %3005 = vxpose.xlu0.b32.cont [11/16] %v2989, 128
        %3006 = vxpose.xlu0.b32.cont [12/16] %v2990, 128
        %3007 = vxpose.xlu0.b32.cont [13/16] %v2991, 128
        %3008 = vxpose.xlu0.b32.cont [14/16] %v2992, 128
        %3009 = vxpose.xlu0.b32.cont [15/16] %v2993, 128
        %3010 = vxpose.xlu0.b32.end [16/16] %v2994, 128
        %v3011 = vpop.trf.xlu0
        %v3012 = vpop.trf.xlu0
        %v3013 = vpop.trf.xlu0
        %v3014 = vpop.trf.xlu0
        %v3015 = vpop.trf.xlu0
        %v3016 = vpop.trf.xlu0
        %v3017 = vpop.trf.xlu0
        %v3018 = vpop.trf.xlu0
        %v3019 = vpop.trf.xlu0
        %v3020 = vpop.trf.xlu0
        %v3021 = vpop.trf.xlu0
        %v3022 = vpop.trf.xlu0
        %v3023 = vpop.trf.xlu0
        %v3024 = vpop.trf.xlu0
        %v3025 = vpop.trf.xlu0
        %v3026 = vpop.trf.xlu0
        %3027 = vst [vmem:[%s323] sm:$0xff] %v3011
        %3028 = vst [vmem:[%s323 + $0x8] sm:$0xff] %v3012
        %3029 = vst [vmem:[%s323 + $0x10] sm:$0xff] %v3013
        %3030 = vst [vmem:[%s323 + $0x18] sm:$0xff] %v3014
        %3031 = vst [vmem:[%s323 + $0x20] sm:$0xff] %v3015
        %3032 = vst [vmem:[%s323 + $0x28] sm:$0xff] %v3016
        %3033 = vst [vmem:[%s323 + $0x30] sm:$0xff] %v3017
        %3034 = vst [vmem:[%s323 + $0x38] sm:$0xff] %v3018
        %3035 = vst [vmem:[%s323 + $0x40] sm:$0xff] %v3019
        %3036 = vst [vmem:[%s323 + $0x48] sm:$0xff] %v3020
        %3037 = vst [vmem:[%s323 + $0x50] sm:$0xff] %v3021
        %3038 = vst [vmem:[%s323 + $0x58] sm:$0xff] %v3022
        %3039 = vst [vmem:[%s323 + $0x60] sm:$0xff] %v3023
        %3040 = vst [vmem:[%s323 + $0x68] sm:$0xff] %v3024
        %3041 = vst [vmem:[%s323 + $0x70] sm:$0xff] %v3025
        %3042 = vst [vmem:[%s323 + $0x78] sm:$0xff] %v3026
        %s3043 = sand.u32 %s225, 1
        %s3044 = scalar_lea.sflag [#allocation3], %s3043
        %s3045 = sand.u32 %s225, 1
        %s3046 = smul.addr %s3045, 128
        %s3047 = scalar_lea.vmem [#allocation2], %s3046
        // Predicated region
        $region57: #{nonlocal_net_flow.1} parent=55 // pred_check
          %p3048 = pneg %p235
        $region58: #{nonlocal_net_flow.1} parent=55 // pred_check_branch
          %3050 = sbr.rel (%p3048) target = $region60
        $region59: #{nonlocal_net_flow.1} parent=55 // pred_region
          %3052 = vsyncadd %s3044, 0
          %s3053 = smul.addr %s23, 16
          %s3054 = smul.addr %s3053, 8
          %s3055 = scalar_lea.hbm %s9, %s3054
          %s3056 = sshll.u32 %s3047, 4
          %s3057 = int_to_ptr.vmem [resolvable:$true] %s3056
          %s3058 = sshll.u32 %s3055, 4
          %s3059 = int_to_ptr.hbm [resolvable:$true] %s3058
          %3064 = dma.vmem_to_hbm [thread:$0]  %s3057, 2048, %s3059, %s3044, 128, 128, 8
        $region60: #{nonlocal_net_flow.1} parent=55 // pred_fallthru
          _
      $region56: #{nonlocal_net_flow.1} parent=5 // pred_fallthru
        _
      %p3065 = scmp.le.s32.totalorder 2, %s18
      // Predicated region
      $region61: #{nonlocal_net_flow.1} parent=5 // pred_check
        %p3066 = pneg %p3065
      $region62: #{nonlocal_net_flow.1} parent=5 // pred_check_branch
        %3068 = sbr.rel (%p3066) target = $region64
      $region63: #{nonlocal_net_flow.1} parent=5 // pred_region
        %s3069 = ssub.s32 %s18, 2
        // Predicated region
        $region65: #{nonlocal_net_flow.1} parent=63 // pred_check
          %p3070 = pneg %p241
        $region66: #{nonlocal_net_flow.1} parent=63 // pred_check_branch
          %3072 = sbr.rel (%p3070) target = $region68
        $region67: #{nonlocal_net_flow.1} parent=63 // pred_region
          %s3073 = sand.u32 %s226, 1
          %s3074 = scalar_lea.sflag [#allocation3], %s3073
          %s3075 = sand.u32 %s226, 1
          %s3076 = smul.addr %s3075, 128
          %s3077 = scalar_lea.vmem [#allocation2], %s3076
          %3079 = dma.done %s3074, 2048
        $region68: #{nonlocal_net_flow.1} parent=63 // pred_fallthru
          _
      $region64: #{nonlocal_net_flow.1} parent=5 // pred_fallthru
        _
    $region6: #{nonlocal_net_flow.1} parent=1 // loop_footer
      %s22 = sadd.s32 1, %s18
    $region7: #{nonlocal_net_flow.1} parent=1 // loop_footer_branch
      %17 = sbr.rel target = $region3
    $region8: #{nonlocal_net_flow.1} parent=1 // loop_exit
      _
    %3080 = vsyncpa [#allocation3], 1
    %s3081 = scalar_lea.sflag [#allocation3], 1
    %3082 = vsyncpa %s3081, 1

</llo_original>
